<compile_context>
chip_gen: v5e
topology: v5e:2x2
jax: 0.10.0
libtpu: 0.0.40
codegen_flags: <defaults>
</compile_context>

<pallas_src>
import functools

import jax
import jax.numpy as jnp
from jax import lax
from jax.experimental import pallas as pl
from jax.experimental.pallas import tpu as pltpu


# ----------------------------------------------------------------------------
# Pallas kernel: fused GEMM (bf16 MXU, f32 accumulate) + bias + optional ReLU
# ----------------------------------------------------------------------------
def _gemm_bias_act_kernel(w_ref, x_ref, b_ref, o_ref, *, apply_relu):
    w = w_ref[...].astype(jnp.bfloat16)
    x = x_ref[...].astype(jnp.bfloat16)
    acc = jnp.dot(w, x, preferred_element_type=jnp.float32)
    acc = acc + b_ref[...]                      # (R, 1) broadcast over lanes
    if apply_relu:
        acc = jnp.maximum(acc, 0.0)
    o_ref[...] = acc.astype(o_ref.dtype)


def _round_up(x, m):
    return (x + m - 1) // m * m


def gemm_bias_act(w, patches_t, bias, apply_relu, *, tm_max=512):
    """out(R, M) = w(R, K) @ patches_t(K, M) + bias(R,)  [+ ReLU].

    M (= batch * spatial) is the lane dimension, tiled by `tm` and marked
    "parallel" so the grid can be split across TensorCores (v7x megacore).
    """
    r, k = w.shape
    m = patches_t.shape[1]
    rp = _round_up(r, 8)                        # sublane-aligned output rows
    tm = tm_max if m >= tm_max else _round_up(m, 128)
    mp = _round_up(m, tm)

    wp = jnp.pad(w, ((0, rp - r), (0, 0)))
    bp = jnp.pad(bias, (0, rp - r)).reshape(rp, 1).astype(jnp.float32)
    xp = jnp.pad(patches_t, ((0, 0), (0, mp - m)))

    kernel = functools.partial(_gemm_bias_act_kernel, apply_relu=apply_relu)
    out = pl.pallas_call(
        kernel,
        out_shape=jax.ShapeDtypeStruct((rp, mp), jnp.float32),
        grid=(mp // tm,),
        in_specs=[
            pl.BlockSpec((rp, k), lambda i: (0, 0)),    # weights: resident
            pl.BlockSpec((k, tm), lambda i: (0, i)),    # patches: lane-tiled
            pl.BlockSpec((rp, 1), lambda i: (0, 0)),    # bias
        ],
        out_specs=pl.BlockSpec((rp, tm), lambda i: (0, i)),
        compiler_params=pltpu.CompilerParams(
            dimension_semantics=("parallel",),
            vmem_limit_bytes=32 * 1024 * 1024,
        ),
        cost_estimate=pl.CostEstimate(
            flops=2 * rp * k * mp,
            transcendentals=0,
            bytes_accessed=4 * (rp * k + k * mp + rp + rp * mp),
        ),
    )(wp, xp, bp)
    return out[:r, :m]


# ----------------------------------------------------------------------------
# Conv2d(k=4, s=2, p=1) -- channel-major activations, lane-dense GEMM
# ----------------------------------------------------------------------------
def conv2d_s2(x_cf, w, b, relu):
    """x_cf: (IC, N, H, W), w: (OC, IC, 4, 4) [torch Conv2d], b: (OC,)."""
    oc, ic = w.shape[0], w.shape[1]
    _, n, h, wd = x_cf.shape
    ho, wo = h // 2, wd // 2
    xp = jnp.pad(x_cf, ((0, 0), (0, 0), (1, 1), (1, 1)))
    # tap (ky, kx) of the 4x4 stride-2 window -> unit-layout strided slice
    taps = [xp[:, :, ky:ky + h:2, kx:kx + wd:2]
            for ky in range(4) for kx in range(4)]            # (IC, N, Ho, Wo)
    pt = jnp.concatenate(taps, axis=0).reshape(16 * ic, n * ho * wo)
    w2 = w.transpose(0, 2, 3, 1).reshape(oc, 16 * ic)         # (OC, ky*kx*IC)
    out = gemm_bias_act(w2, pt, b, relu)                      # (OC, M)
    return out.reshape(oc, n, ho, wo)


# ----------------------------------------------------------------------------
# ConvTranspose2d(k=4, s=2, p=1) -- sub-pixel decomposition (no zero dilation)
# ----------------------------------------------------------------------------
# For phase bit a (output row parity): contributing window rows dy and the
# matching kernel taps ky, i.e. out[2m+a] = sum_dy x[m-1+dy] * w[.., ky, ..].
_PHASE_TAPS = {
    0: ((0, 3), (1, 1)),     # (dy, ky) pairs for even outputs
    1: ((1, 2), (2, 0)),     # (dy, ky) pairs for odd outputs
}


def _build_deconv_weight(w):
    """w: (IC, OC, 4, 4) [torch ConvTranspose2d] -> (4*OC, 9*IC) phase-major."""
    ic, oc = w.shape[0], w.shape[1]
    wc = jnp.zeros((4, oc, 9, ic), w.dtype)
    for a in (0, 1):
        for b in (0, 1):
            ph = 2 * a + b
            for dy, ky in _PHASE_TAPS[a]:
                for dx, kx in _PHASE_TAPS[b]:
                    t = 3 * dy + dx
                    wc = wc.at[ph, :, t, :].set(w[:, :, ky, kx].T)
    return wc.reshape(4 * oc, 9 * ic)


def conv_transpose2d_s2(x_cf, w, b, relu):
    """x_cf: (IC, N, H, W), w: (IC, OC, 4, 4) [torch ConvTranspose2d]."""
    ic, oc = w.shape[0], w.shape[1]
    _, n, h, wd = x_cf.shape
    xp = jnp.pad(x_cf, ((0, 0), (0, 0), (1, 1), (1, 1)))
    # single stride-1 3x3 patch matrix shared by all four output phases
    taps = [xp[:, :, dy:dy + h, dx:dx + wd]
            for dy in range(3) for dx in range(3)]            # (IC, N, H, W)
    pt = jnp.concatenate(taps, axis=0).reshape(9 * ic, n * h * wd)
    wc = _build_deconv_weight(w)                              # (4*OC, 9*IC)
    bc = jnp.tile(b, 4)
    y = gemm_bias_act(wc, pt, bc, relu)                       # (4*OC, N*H*W)
    y = y.reshape(2, 2, oc, n, h, wd)
    # depth-to-space: out[oc, n, 2y+a, 2x+b] = y[a, b, oc, n, y, x]
    return y.transpose(2, 3, 4, 0, 5, 1).reshape(oc, n, 2 * h, 2 * wd)


# ----------------------------------------------------------------------------
# Model: deterministic parameters + forward
# ----------------------------------------------------------------------------
def init_params(key):
    def make(key, shape, fan_in):
        bound = 1.0 / jnp.sqrt(jnp.float32(fan_in))
        return jax.random.uniform(key, shape, jnp.float32, -bound, bound)

    ks = jax.random.split(key, 12)
    p = {}
    # encoder: Conv2d(3,12,4,s2,p1), Conv2d(12,24,4,s2,p1), Conv2d(24,48,4,s2,p1)
    p["ew1"] = make(ks[0], (12, 3, 4, 4), 3 * 16)
    p["eb1"] = make(ks[1], (12,), 3 * 16)
    p["ew2"] = make(ks[2], (24, 12, 4, 4), 12 * 16)
    p["eb2"] = make(ks[3], (24,), 12 * 16)
    p["ew3"] = make(ks[4], (48, 24, 4, 4), 24 * 16)
    p["eb3"] = make(ks[5], (48,), 24 * 16)
    # decoder: ConvTranspose2d(48,24), (24,12), (12,3) -- weight (InC, OutC, 4, 4)
    p["dw1"] = make(ks[6], (48, 24, 4, 4), 48 * 16)
    p["db1"] = make(ks[7], (24,), 48 * 16)
    p["dw2"] = make(ks[8], (24, 12, 4, 4), 24 * 16)
    p["db2"] = make(ks[9], (12,), 24 * 16)
    p["dw3"] = make(ks[10], (12, 3, 4, 4), 12 * 16)
    p["db3"] = make(ks[11], (3,), 12 * 16)
    return p


def autoencoder_forward(p, x):
    h = jnp.transpose(x, (1, 0, 2, 3))            # NCHW -> (C, N, H, W) once
    # encoder
    h = conv2d_s2(h, p["ew1"], p["eb1"], True)
    h = conv2d_s2(h, p["ew2"], p["eb2"], True)
    h = conv2d_s2(h, p["ew3"], p["eb3"], True)
    # decoder
    h = conv_transpose2d_s2(h, p["dw1"], p["db1"], True)
    h = conv_transpose2d_s2(h, p["dw2"], p["db2"], True)
    h = conv_transpose2d_s2(h, p["dw3"], p["db3"], False)
    return jnp.transpose(h, (1, 0, 2, 3))         # back to NCHW once


# ----------------------------------------------------------------------------
# Pure-XLA reference (for a numerical sanity check of the Pallas path)
# ----------------------------------------------------------------------------
def _reference_forward(p, x):
    dn = ("NCHW", "OIHW", "NCHW")

    def conv(h, w, b):
        o = lax.conv_general_dilated(h, w, (2, 2), [(1, 1), (1, 1)],
                                     dimension_numbers=dn)
        return o + b[None, :, None, None]

    def deconv(h, w, b):
        wk = jnp.flip(w, (2, 3)).transpose(1, 0, 2, 3)
        o = lax.conv_general_dilated(h, wk, (1, 1), [(2, 2), (2, 2)],
                                     lhs_dilation=(2, 2), dimension_numbers=dn)
        return o + b[None, :, None, None]

    h = jax.nn.relu(conv(x, p["ew1"], p["eb1"]))
    h = jax.nn.relu(conv(h, p["ew2"], p["eb2"]))
    h = jax.nn.relu(conv(h, p["ew3"], p["eb3"]))
    h = jax.nn.relu(deconv(h, p["dw1"], p["db1"]))
    h = jax.nn.relu(deconv(h, p["dw2"], p["db2"]))
    h = deconv(h, p["dw3"], p["db3"])
    return h


if __name__ == "__main__":
    key = jax.random.PRNGKey(0)
    pkey, xkey = jax.random.split(key)
    params = init_params(pkey)

    # small CIFAR-like input: batch=2, channels=3, 16x16 spatial (NCHW)
    x = jax.random.normal(xkey, (2, 3, 16, 16), dtype=jnp.float32)

    fwd = jax.jit(autoencoder_forward)
    out = fwd(params, x)
    jax.block_until_ready(out)

    assert out.shape == (2, 3, 16, 16), out.shape
    assert out.dtype == jnp.float32

    ref = _reference_forward(params, x)
    max_err = float(jnp.max(jnp.abs(out - ref)))
    assert max_err < 5e-2, f"numerical mismatch vs XLA reference: {max_err}"

    print("KERNEL_OK")
</pallas_src>

<mosaic_0001>
module attributes {stable_mosaic.version = 11 : i64} {
  func.func @_gemm_bias_act_kernel(%arg0: i32, %arg1: memref<16x48xf32, #tpu.memory_space<vmem>>, %arg2: memref<48x128xf32, #tpu.memory_space<vmem>>, %arg3: memref<16x1xf32, #tpu.memory_space<vmem>>, %arg4: memref<16x128xf32, #tpu.memory_space<vmem>>) attributes {dimension_semantics = [#tpu.dimension_semantics<parallel>], iteration_bounds = array<i64: 1>, scalar_prefetch = 0 : i64, scratch_operands = 0 : i64, tpu.core_type = #tpu.core_type<tc>, window_params = [{pipeline_mode = #tpu.pipeline_mode<synchronous>, transform_indices = @transform_0, window_bounds = array<i64: 16, 48>}, {transform_indices = @transform_1, window_bounds = array<i64: 48, 128>}, {pipeline_mode = #tpu.pipeline_mode<synchronous>, transform_indices = @transform_2, window_bounds = array<i64: 16, 1>}, {transform_indices = @transform_3, window_bounds = array<i64: 16, 128>}]} {
    %c0 = arith.constant 0 : index
    %c0_0 = arith.constant 0 : index
    %0 = vector.load %arg1[%c0, %c0_0] : memref<16x48xf32, #tpu.memory_space<vmem>>, vector<16x48xf32>
    %1 = arith.truncf %0 : vector<16x48xf32> to vector<16x48xbf16>
    %c0_1 = arith.constant 0 : index
    %c0_2 = arith.constant 0 : index
    %2 = vector.load %arg2[%c0_1, %c0_2] : memref<48x128xf32, #tpu.memory_space<vmem>>, vector<48x128xf32>
    %3 = arith.truncf %2 : vector<48x128xf32> to vector<48x128xbf16>
    %cst = arith.constant dense<0.000000e+00> : vector<16x128xf32>
    %4 = tpu.matmul %1, %3, %cst {dimension_numbers = #tpu.dot_dimension_numbers<[1], [0], [0], [1], [0, 0, 1, 1], [], []>} : vector<16x48xbf16>, vector<48x128xbf16>, vector<16x128xf32> -> vector<16x128xf32>
    %c0_3 = arith.constant 0 : index
    %c0_4 = arith.constant 0 : index
    %5 = vector.load %arg3[%c0_3, %c0_4] : memref<16x1xf32, #tpu.memory_space<vmem>>, vector<16x1xf32>
    %6 = vector.broadcast %5 : vector<16x1xf32> to vector<16x128xf32>
    %7 = arith.addf %4, %6 : vector<16x128xf32>
    %cst_5 = arith.constant 0.000000e+00 : f32
    %8 = vector.broadcast %cst_5 : f32 to vector<16x128xf32>
    %9 = arith.maximumf %7, %8 : vector<16x128xf32>
    %c0_6 = arith.constant 0 : index
    %c0_7 = arith.constant 0 : index
    %10 = vector.load %arg4[%c0_6, %c0_7] : memref<16x128xf32, #tpu.memory_space<vmem>>, vector<16x128xf32>
    tpu.vector_store %arg4[%c0_6, %c0_7], %9 {strides = array<i32>} : memref<16x128xf32, #tpu.memory_space<vmem>>, vector<16x128xf32>,
    return
  }
  func.func @transform_0(%arg0: i32) -> (i32, i32) {
    %c0_i32 = arith.constant 0 : i32
    %c0_i32_0 = arith.constant 0 : i32
    %c0_i32_1 = arith.constant 0 : i32
    return %c0_i32, %c0_i32_0 : i32, i32
  }
  func.func @transform_1(%arg0: i32) -> (i32, i32) {
    %c0_i32 = arith.constant 0 : i32
    %c0_i32_0 = arith.constant 0 : i32
    return %c0_i32, %arg0 : i32, i32
  }
  func.func @transform_2(%arg0: i32) -> (i32, i32) {
    %c0_i32 = arith.constant 0 : i32
    %c0_i32_0 = arith.constant 0 : i32
    %c0_i32_1 = arith.constant 0 : i32
    return %c0_i32, %c0_i32_0 : i32, i32
  }
  func.func @transform_3(%arg0: i32) -> (i32, i32) {
    %c0_i32 = arith.constant 0 : i32
    %c0_i32_0 = arith.constant 0 : i32
    return %c0_i32, %arg0 : i32, i32
  }
}

module attributes {stable_mosaic.version = 11 : i64} {
  func.func @_gemm_bias_act_kernel(%arg0: i32, %arg1: memref<24x192xf32, #tpu.memory_space<vmem>>, %arg2: memref<192x128xf32, #tpu.memory_space<vmem>>, %arg3: memref<24x1xf32, #tpu.memory_space<vmem>>, %arg4: memref<24x128xf32, #tpu.memory_space<vmem>>) attributes {dimension_semantics = [#tpu.dimension_semantics<parallel>], iteration_bounds = array<i64: 1>, scalar_prefetch = 0 : i64, scratch_operands = 0 : i64, tpu.core_type = #tpu.core_type<tc>, window_params = [{pipeline_mode = #tpu.pipeline_mode<synchronous>, transform_indices = @transform_0, window_bounds = array<i64: 24, 192>}, {transform_indices = @transform_1, window_bounds = array<i64: 192, 128>}, {pipeline_mode = #tpu.pipeline_mode<synchronous>, transform_indices = @transform_2, window_bounds = array<i64: 24, 1>}, {transform_indices = @transform_3, window_bounds = array<i64: 24, 128>}]} {
    %c0 = arith.constant 0 : index
    %c0_0 = arith.constant 0 : index
    %0 = vector.load %arg1[%c0, %c0_0] : memref<24x192xf32, #tpu.memory_space<vmem>>, vector<24x192xf32>
    %1 = arith.truncf %0 : vector<24x192xf32> to vector<24x192xbf16>
    %c0_1 = arith.constant 0 : index
    %c0_2 = arith.constant 0 : index
    %2 = vector.load %arg2[%c0_1, %c0_2] : memref<192x128xf32, #tpu.memory_space<vmem>>, vector<192x128xf32>
    %3 = arith.truncf %2 : vector<192x128xf32> to vector<192x128xbf16>
    %cst = arith.constant dense<0.000000e+00> : vector<24x128xf32>
    %4 = tpu.matmul %1, %3, %cst {dimension_numbers = #tpu.dot_dimension_numbers<[1], [0], [0], [1], [0, 0, 1, 1], [], []>} : vector<24x192xbf16>, vector<192x128xbf16>, vector<24x128xf32> -> vector<24x128xf32>
    %c0_3 = arith.constant 0 : index
    %c0_4 = arith.constant 0 : index
    %5 = vector.load %arg3[%c0_3, %c0_4] : memref<24x1xf32, #tpu.memory_space<vmem>>, vector<24x1xf32>
    %6 = vector.broadcast %5 : vector<24x1xf32> to vector<24x128xf32>
    %7 = arith.addf %4, %6 : vector<24x128xf32>
    %cst_5 = arith.constant 0.000000e+00 : f32
    %8 = vector.broadcast %cst_5 : f32 to vector<24x128xf32>
    %9 = arith.maximumf %7, %8 : vector<24x128xf32>
    %c0_6 = arith.constant 0 : index
    %c0_7 = arith.constant 0 : index
    %10 = vector.load %arg4[%c0_6, %c0_7] : memref<24x128xf32, #tpu.memory_space<vmem>>, vector<24x128xf32>
    tpu.vector_store %arg4[%c0_6, %c0_7], %9 {strides = array<i32>} : memref<24x128xf32, #tpu.memory_space<vmem>>, vector<24x128xf32>,
    return
  }
  func.func @transform_0(%arg0: i32) -> (i32, i32) {
    %c0_i32 = arith.constant 0 : i32
    %c0_i32_0 = arith.constant 0 : i32
    %c0_i32_1 = arith.constant 0 : i32
    return %c0_i32, %c0_i32_0 : i32, i32
  }
  func.func @transform_1(%arg0: i32) -> (i32, i32) {
    %c0_i32 = arith.constant 0 : i32
    %c0_i32_0 = arith.constant 0 : i32
    return %c0_i32, %arg0 : i32, i32
  }
  func.func @transform_2(%arg0: i32) -> (i32, i32) {
    %c0_i32 = arith.constant 0 : i32
    %c0_i32_0 = arith.constant 0 : i32
    %c0_i32_1 = arith.constant 0 : i32
    return %c0_i32, %c0_i32_0 : i32, i32
  }
  func.func @transform_3(%arg0: i32) -> (i32, i32) {
    %c0_i32 = arith.constant 0 : i32
    %c0_i32_0 = arith.constant 0 : i32
    return %c0_i32, %arg0 : i32, i32
  }
}

module attributes {stable_mosaic.version = 11 : i64} {
  func.func @_gemm_bias_act_kernel(%arg0: i32, %arg1: memref<48x384xf32, #tpu.memory_space<vmem>>, %arg2: memref<384x128xf32, #tpu.memory_space<vmem>>, %arg3: memref<48x1xf32, #tpu.memory_space<vmem>>, %arg4: memref<48x128xf32, #tpu.memory_space<vmem>>) attributes {dimension_semantics = [#tpu.dimension_semantics<parallel>], iteration_bounds = array<i64: 1>, scalar_prefetch = 0 : i64, scratch_operands = 0 : i64, tpu.core_type = #tpu.core_type<tc>, window_params = [{pipeline_mode = #tpu.pipeline_mode<synchronous>, transform_indices = @transform_0, window_bounds = array<i64: 48, 384>}, {transform_indices = @transform_1, window_bounds = array<i64: 384, 128>}, {pipeline_mode = #tpu.pipeline_mode<synchronous>, transform_indices = @transform_2, window_bounds = array<i64: 48, 1>}, {transform_indices = @transform_3, window_bounds = array<i64: 48, 128>}]} {
    %c0 = arith.constant 0 : index
    %c0_0 = arith.constant 0 : index
    %0 = vector.load %arg1[%c0, %c0_0] : memref<48x384xf32, #tpu.memory_space<vmem>>, vector<48x384xf32>
    %1 = arith.truncf %0 : vector<48x384xf32> to vector<48x384xbf16>
    %c0_1 = arith.constant 0 : index
    %c0_2 = arith.constant 0 : index
    %2 = vector.load %arg2[%c0_1, %c0_2] : memref<384x128xf32, #tpu.memory_space<vmem>>, vector<384x128xf32>
    %3 = arith.truncf %2 : vector<384x128xf32> to vector<384x128xbf16>
    %cst = arith.constant dense<0.000000e+00> : vector<48x128xf32>
    %4 = tpu.matmul %1, %3, %cst {dimension_numbers = #tpu.dot_dimension_numbers<[1], [0], [0], [1], [0, 0, 1, 1], [], []>} : vector<48x384xbf16>, vector<384x128xbf16>, vector<48x128xf32> -> vector<48x128xf32>
    %c0_3 = arith.constant 0 : index
    %c0_4 = arith.constant 0 : index
    %5 = vector.load %arg3[%c0_3, %c0_4] : memref<48x1xf32, #tpu.memory_space<vmem>>, vector<48x1xf32>
    %6 = vector.broadcast %5 : vector<48x1xf32> to vector<48x128xf32>
    %7 = arith.addf %4, %6 : vector<48x128xf32>
    %cst_5 = arith.constant 0.000000e+00 : f32
    %8 = vector.broadcast %cst_5 : f32 to vector<48x128xf32>
    %9 = arith.maximumf %7, %8 : vector<48x128xf32>
    %c0_6 = arith.constant 0 : index
    %c0_7 = arith.constant 0 : index
    %10 = vector.load %arg4[%c0_6, %c0_7] : memref<48x128xf32, #tpu.memory_space<vmem>>, vector<48x128xf32>
    tpu.vector_store %arg4[%c0_6, %c0_7], %9 {strides = array<i32>} : memref<48x128xf32, #tpu.memory_space<vmem>>, vector<48x128xf32>,
    return
  }
  func.func @transform_0(%arg0: i32) -> (i32, i32) {
    %c0_i32 = arith.constant 0 : i32
    %c0_i32_0 = arith.constant 0 : i32
    %c0_i32_1 = arith.constant 0 : i32
    return %c0_i32, %c0_i32_0 : i32, i32
  }
  func.func @transform_1(%arg0: i32) -> (i32, i32) {
    %c0_i32 = arith.constant 0 : i32
    %c0_i32_0 = arith.constant 0 : i32
    return %c0_i32, %arg0 : i32, i32
  }
  func.func @transform_2(%arg0: i32) -> (i32, i32) {
    %c0_i32 = arith.constant 0 : i32
    %c0_i32_0 = arith.constant 0 : i32
    %c0_i32_1 = arith.constant 0 : i32
    return %c0_i32, %c0_i32_0 : i32, i32
  }
  func.func @transform_3(%arg0: i32) -> (i32, i32) {
    %c0_i32 = arith.constant 0 : i32
    %c0_i32_0 = arith.constant 0 : i32
    return %c0_i32, %arg0 : i32, i32
  }
}

module attributes {stable_mosaic.version = 11 : i64} {
  func.func @_gemm_bias_act_kernel(%arg0: i32, %arg1: memref<96x432xf32, #tpu.memory_space<vmem>>, %arg2: memref<432x128xf32, #tpu.memory_space<vmem>>, %arg3: memref<96x1xf32, #tpu.memory_space<vmem>>, %arg4: memref<96x128xf32, #tpu.memory_space<vmem>>) attributes {dimension_semantics = [#tpu.dimension_semantics<parallel>], iteration_bounds = array<i64: 1>, scalar_prefetch = 0 : i64, scratch_operands = 0 : i64, tpu.core_type = #tpu.core_type<tc>, window_params = [{pipeline_mode = #tpu.pipeline_mode<synchronous>, transform_indices = @transform_0, window_bounds = array<i64: 96, 432>}, {transform_indices = @transform_1, window_bounds = array<i64: 432, 128>}, {pipeline_mode = #tpu.pipeline_mode<synchronous>, transform_indices = @transform_2, window_bounds = array<i64: 96, 1>}, {transform_indices = @transform_3, window_bounds = array<i64: 96, 128>}]} {
    %c0 = arith.constant 0 : index
    %c0_0 = arith.constant 0 : index
    %0 = vector.load %arg1[%c0, %c0_0] : memref<96x432xf32, #tpu.memory_space<vmem>>, vector<96x432xf32>
    %1 = arith.truncf %0 : vector<96x432xf32> to vector<96x432xbf16>
    %c0_1 = arith.constant 0 : index
    %c0_2 = arith.constant 0 : index
    %2 = vector.load %arg2[%c0_1, %c0_2] : memref<432x128xf32, #tpu.memory_space<vmem>>, vector<432x128xf32>
    %3 = arith.truncf %2 : vector<432x128xf32> to vector<432x128xbf16>
    %cst = arith.constant dense<0.000000e+00> : vector<96x128xf32>
    %4 = tpu.matmul %1, %3, %cst {dimension_numbers = #tpu.dot_dimension_numbers<[1], [0], [0], [1], [0, 0, 1, 1], [], []>} : vector<96x432xbf16>, vector<432x128xbf16>, vector<96x128xf32> -> vector<96x128xf32>
    %c0_3 = arith.constant 0 : index
    %c0_4 = arith.constant 0 : index
    %5 = vector.load %arg3[%c0_3, %c0_4] : memref<96x1xf32, #tpu.memory_space<vmem>>, vector<96x1xf32>
    %6 = vector.broadcast %5 : vector<96x1xf32> to vector<96x128xf32>
    %7 = arith.addf %4, %6 : vector<96x128xf32>
    %cst_5 = arith.constant 0.000000e+00 : f32
    %8 = vector.broadcast %cst_5 : f32 to vector<96x128xf32>
    %9 = arith.maximumf %7, %8 : vector<96x128xf32>
    %c0_6 = arith.constant 0 : index
    %c0_7 = arith.constant 0 : index
    %10 = vector.load %arg4[%c0_6, %c0_7] : memref<96x128xf32, #tpu.memory_space<vmem>>, vector<96x128xf32>
    tpu.vector_store %arg4[%c0_6, %c0_7], %9 {strides = array<i32>} : memref<96x128xf32, #tpu.memory_space<vmem>>, vector<96x128xf32>,
    return
  }
  func.func @transform_0(%arg0: i32) -> (i32, i32) {
    %c0_i32 = arith.constant 0 : i32
    %c0_i32_0 = arith.constant 0 : i32
    %c0_i32_1 = arith.constant 0 : i32
    return %c0_i32, %c0_i32_0 : i32, i32
  }
  func.func @transform_1(%arg0: i32) -> (i32, i32) {
    %c0_i32 = arith.constant 0 : i32
    %c0_i32_0 = arith.constant 0 : i32
    return %c0_i32, %arg0 : i32, i32
  }
  func.func @transform_2(%arg0: i32) -> (i32, i32) {
    %c0_i32 = arith.constant 0 : i32
    %c0_i32_0 = arith.constant 0 : i32
    %c0_i32_1 = arith.constant 0 : i32
    return %c0_i32, %c0_i32_0 : i32, i32
  }
  func.func @transform_3(%arg0: i32) -> (i32, i32) {
    %c0_i32 = arith.constant 0 : i32
    %c0_i32_0 = arith.constant 0 : i32
    return %c0_i32, %arg0 : i32, i32
  }
}

module attributes {stable_mosaic.version = 11 : i64} {
  func.func @_gemm_bias_act_kernel(%arg0: i32, %arg1: memref<48x216xf32, #tpu.memory_space<vmem>>, %arg2: memref<216x128xf32, #tpu.memory_space<vmem>>, %arg3: memref<48x1xf32, #tpu.memory_space<vmem>>, %arg4: memref<48x128xf32, #tpu.memory_space<vmem>>) attributes {dimension_semantics = [#tpu.dimension_semantics<parallel>], iteration_bounds = array<i64: 1>, scalar_prefetch = 0 : i64, scratch_operands = 0 : i64, tpu.core_type = #tpu.core_type<tc>, window_params = [{pipeline_mode = #tpu.pipeline_mode<synchronous>, transform_indices = @transform_0, window_bounds = array<i64: 48, 216>}, {transform_indices = @transform_1, window_bounds = array<i64: 216, 128>}, {pipeline_mode = #tpu.pipeline_mode<synchronous>, transform_indices = @transform_2, window_bounds = array<i64: 48, 1>}, {transform_indices = @transform_3, window_bounds = array<i64: 48, 128>}]} {
    %c0 = arith.constant 0 : index
    %c0_0 = arith.constant 0 : index
    %0 = vector.load %arg1[%c0, %c0_0] : memref<48x216xf32, #tpu.memory_space<vmem>>, vector<48x216xf32>
    %1 = arith.truncf %0 : vector<48x216xf32> to vector<48x216xbf16>
    %c0_1 = arith.constant 0 : index
    %c0_2 = arith.constant 0 : index
    %2 = vector.load %arg2[%c0_1, %c0_2] : memref<216x128xf32, #tpu.memory_space<vmem>>, vector<216x128xf32>
    %3 = arith.truncf %2 : vector<216x128xf32> to vector<216x128xbf16>
    %cst = arith.constant dense<0.000000e+00> : vector<48x128xf32>
    %4 = tpu.matmul %1, %3, %cst {dimension_numbers = #tpu.dot_dimension_numbers<[1], [0], [0], [1], [0, 0, 1, 1], [], []>} : vector<48x216xbf16>, vector<216x128xbf16>, vector<48x128xf32> -> vector<48x128xf32>
    %c0_3 = arith.constant 0 : index
    %c0_4 = arith.constant 0 : index
    %5 = vector.load %arg3[%c0_3, %c0_4] : memref<48x1xf32, #tpu.memory_space<vmem>>, vector<48x1xf32>
    %6 = vector.broadcast %5 : vector<48x1xf32> to vector<48x128xf32>
    %7 = arith.addf %4, %6 : vector<48x128xf32>
    %cst_5 = arith.constant 0.000000e+00 : f32
    %8 = vector.broadcast %cst_5 : f32 to vector<48x128xf32>
    %9 = arith.maximumf %7, %8 : vector<48x128xf32>
    %c0_6 = arith.constant 0 : index
    %c0_7 = arith.constant 0 : index
    %10 = vector.load %arg4[%c0_6, %c0_7] : memref<48x128xf32, #tpu.memory_space<vmem>>, vector<48x128xf32>
    tpu.vector_store %arg4[%c0_6, %c0_7], %9 {strides = array<i32>} : memref<48x128xf32, #tpu.memory_space<vmem>>, vector<48x128xf32>,
    return
  }
  func.func @transform_0(%arg0: i32) -> (i32, i32) {
    %c0_i32 = arith.constant 0 : i32
    %c0_i32_0 = arith.constant 0 : i32
    %c0_i32_1 = arith.constant 0 : i32
    return %c0_i32, %c0_i32_0 : i32, i32
  }
  func.func @transform_1(%arg0: i32) -> (i32, i32) {
    %c0_i32 = arith.constant 0 : i32
    %c0_i32_0 = arith.constant 0 : i32
    return %c0_i32, %arg0 : i32, i32
  }
  func.func @transform_2(%arg0: i32) -> (i32, i32) {
    %c0_i32 = arith.constant 0 : i32
    %c0_i32_0 = arith.constant 0 : i32
    %c0_i32_1 = arith.constant 0 : i32
    return %c0_i32, %c0_i32_0 : i32, i32
  }
  func.func @transform_3(%arg0: i32) -> (i32, i32) {
    %c0_i32 = arith.constant 0 : i32
    %c0_i32_0 = arith.constant 0 : i32
    return %c0_i32, %arg0 : i32, i32
  }
}

module attributes {stable_mosaic.version = 11 : i64} {
  func.func @_gemm_bias_act_kernel(%arg0: i32, %arg1: memref<16x108xf32, #tpu.memory_space<vmem>>, %arg2: memref<108x128xf32, #tpu.memory_space<vmem>>, %arg3: memref<16x1xf32, #tpu.memory_space<vmem>>, %arg4: memref<16x128xf32, #tpu.memory_space<vmem>>) attributes {dimension_semantics = [#tpu.dimension_semantics<parallel>], iteration_bounds = array<i64: 1>, scalar_prefetch = 0 : i64, scratch_operands = 0 : i64, tpu.core_type = #tpu.core_type<tc>, window_params = [{pipeline_mode = #tpu.pipeline_mode<synchronous>, transform_indices = @transform_0, window_bounds = array<i64: 16, 108>}, {transform_indices = @transform_1, window_bounds = array<i64: 108, 128>}, {pipeline_mode = #tpu.pipeline_mode<synchronous>, transform_indices = @transform_2, window_bounds = array<i64: 16, 1>}, {transform_indices = @transform_3, window_bounds = array<i64: 16, 128>}]} {
    %c0 = arith.constant 0 : index
    %c0_0 = arith.constant 0 : index
    %0 = vector.load %arg1[%c0, %c0_0] : memref<16x108xf32, #tpu.memory_space<vmem>>, vector<16x108xf32>
    %1 = arith.truncf %0 : vector<16x108xf32> to vector<16x108xbf16>
    %c0_1 = arith.constant 0 : index
    %c0_2 = arith.constant 0 : index
    %2 = vector.load %arg2[%c0_1, %c0_2] : memref<108x128xf32, #tpu.memory_space<vmem>>, vector<108x128xf32>
    %3 = arith.truncf %2 : vector<108x128xf32> to vector<108x128xbf16>
    %cst = arith.constant dense<0.000000e+00> : vector<16x128xf32>
    %4 = tpu.matmul %1, %3, %cst {dimension_numbers = #tpu.dot_dimension_numbers<[1], [0], [0], [1], [0, 0, 1, 1], [], []>} : vector<16x108xbf16>, vector<108x128xbf16>, vector<16x128xf32> -> vector<16x128xf32>
    %c0_3 = arith.constant 0 : index
    %c0_4 = arith.constant 0 : index
    %5 = vector.load %arg3[%c0_3, %c0_4] : memref<16x1xf32, #tpu.memory_space<vmem>>, vector<16x1xf32>
    %6 = vector.broadcast %5 : vector<16x1xf32> to vector<16x128xf32>
    %7 = arith.addf %4, %6 : vector<16x128xf32>
    %c0_5 = arith.constant 0 : index
    %c0_6 = arith.constant 0 : index
    %8 = vector.load %arg4[%c0_5, %c0_6] : memref<16x128xf32, #tpu.memory_space<vmem>>, vector<16x128xf32>
    tpu.vector_store %arg4[%c0_5, %c0_6], %7 {strides = array<i32>} : memref<16x128xf32, #tpu.memory_space<vmem>>, vector<16x128xf32>,
    return
  }
  func.func @transform_0(%arg0: i32) -> (i32, i32) {
    %c0_i32 = arith.constant 0 : i32
    %c0_i32_0 = arith.constant 0 : i32
    %c0_i32_1 = arith.constant 0 : i32
    return %c0_i32, %c0_i32_0 : i32, i32
  }
  func.func @transform_1(%arg0: i32) -> (i32, i32) {
    %c0_i32 = arith.constant 0 : i32
    %c0_i32_0 = arith.constant 0 : i32
    return %c0_i32, %arg0 : i32, i32
  }
  func.func @transform_2(%arg0: i32) -> (i32, i32) {
    %c0_i32 = arith.constant 0 : i32
    %c0_i32_0 = arith.constant 0 : i32
    %c0_i32_1 = arith.constant 0 : i32
    return %c0_i32, %c0_i32_0 : i32, i32
  }
  func.func @transform_3(%arg0: i32) -> (i32, i32) {
    %c0_i32 = arith.constant 0 : i32
    %c0_i32_0 = arith.constant 0 : i32
    return %c0_i32, %arg0 : i32, i32
  }
}

</mosaic_0001>

<llo_original>
// kernel: autoencoder_forward.6
$region0: #{autoencoder_forward.6}
  #allocation0 [shape = 'u32[]', space=smem, size = 0x4, offset = 0x4, fixed_abs, tag = 'smem constant byte address 0x4 - core index']
  #allocation1 [shape = 'u32[72,128]{1,0:T(1,128)}', space=vmem, size = 0x9000, scoped, tag = 'internal scratch']
  %s0 = inlined_call_operand.vmem [shape: f32[16,48], index: 0, kind: input, shape index: {}]
  %s1 = inlined_call_operand.vmem [shape: f32[48,128], index: 1, kind: input, shape index: {}]
  %s2 = inlined_call_operand.vmem [shape: f32[16,1], index: 2, kind: input, shape index: {}]
  %s3 = inlined_call_operand.vmem [shape: f32[16,128], index: 3, kind: output, shape index: {}]
  %s4 = sld [smem:[#allocation0]]
  $region22: #{autoencoder_forward.6} parent=0
    _
  %s6 = ssub.s32 1, %s4
  %s7 = scalar_select 0, %s6, %s4
  // Predicated region
  $region2: #{autoencoder_forward.6} parent=0 // pred_check
    _
  $region3: #{autoencoder_forward.6} parent=0 // pred_check_branch
    %9 = sbr.rel (0) target = $region5
  $region4: #{autoencoder_forward.6} parent=0 // pred_region
    _
  $region5: #{autoencoder_forward.6} parent=0 // pred_fallthru
    _
  // Predicated region
  $region6: #{autoencoder_forward.6} parent=0 // pred_check
    _
  $region7: #{autoencoder_forward.6} parent=0 // pred_check_branch
    %11 = sbr.rel (0) target = $region9
  $region8: #{autoencoder_forward.6} parent=0 // pred_region
    _
  $region9: #{autoencoder_forward.6} parent=0 // pred_fallthru
    _
  // Predicated region
  $region10: #{autoencoder_forward.6} parent=0 // pred_check
    _
  $region11: #{autoencoder_forward.6} parent=0 // pred_check_branch
    %13 = sbr.rel (0) target = $region13
  $region12: #{autoencoder_forward.6} parent=0 // pred_region
    _
  $region13: #{autoencoder_forward.6} parent=0 // pred_fallthru
    _
  %v15 = vld [vmem:[%s0] sm:$0xff]
  %v16 = vld [vmem:[%s0 + $0x8] sm:$0xff]
  %v17 = vpack.c.bf16 %v16, %v15
  %v18 = vld [vmem:[%s1] sm:$0xff]
  %v19 = vld [vmem:[%s1 + $0x8] sm:$0xff]
  %v20 = vld [vmem:[%s1 + $0x10] sm:$0xff]
  %v21 = vld [vmem:[%s1 + $0x18] sm:$0xff]
  %v22 = vld [vmem:[%s1 + $0x20] sm:$0xff]
  %v23 = vld [vmem:[%s1 + $0x28] sm:$0xff]
  %v24 = vpack.c.bf16 %v19, %v18
  %v25 = vpack.c.bf16 %v21, %v20
  %v26 = vpack.c.bf16 %v23, %v22
  %v27 = vld [vmem:[%s2] sm:$0xff]
  %v28 = vld [vmem:[%s2 + $0x8] sm:$0xff]
  %30 = vset.pattern.permute.xlu0 0
  %31 = vperm.xlu0 %30, %v27
  %v32 = vpop.permute.xlu0 %31
  %35 = vset.pattern.permute.xlu0 0
  %36 = vperm.xlu0 %35, %v28
  %v37 = vpop.permute.xlu0 %36
  %vm39 = vcmask 392192
  %v41 = vsel %vm39, %v17, 0
  %43 = vmatpush.bf16.msra.mxu0 0
  %44 = vmatpush.bf16.msra.mxu0 0
  %45 = vmatpush.bf16.msra.mxu0 0
  %46 = vmatpush.bf16.msra.mxu0 0
  %47 = vmatpush.bf16.msra.mxu0 0
  %48 = vmatpush.bf16.msra.mxu0 %v26
  %49 = vmatpush.bf16.msra.mxu0 %v25
  %50 = vmatpush.bf16.msra.mxu0 %v24
  %51 = vmatmul.bf16.gmra.mxu0 %v41
  %v52 = vpop.f32.mrf.mxu0
  %v53 = vadd.f32 %v32, %v52
  %v54 = vpop.f32.mrf.mxu0
  %v55 = vadd.f32 %v37, %v54
  %56 = vdwg.mxu0
  %v57 = vmax.f32 %v53, 0.0
  %v58 = vmax.f32 %v55, 0.0
  %59 = vst [vmem:[%s3] sm:$0xff] %v57
  %60 = vst [vmem:[%s3 + $0x8] sm:$0xff] %v58
  // Predicated region
  $region14: #{autoencoder_forward.6} parent=0 // pred_check
    _
  $region15: #{autoencoder_forward.6} parent=0 // pred_check_branch
    %62 = sbr.rel (0) target = $region17
  $region16: #{autoencoder_forward.6} parent=0 // pred_region
    _
  $region17: #{autoencoder_forward.6} parent=0 // pred_fallthru
    _
  // Predicated region
  $region18: #{autoencoder_forward.6} parent=0 // pred_check
    _
  $region19: #{autoencoder_forward.6} parent=0 // pred_check_branch
    %64 = sbr.rel (0) target = $region21
  $region20: #{autoencoder_forward.6} parent=0 // pred_region
    _
  $region21: #{autoencoder_forward.6} parent=0 // pred_fallthru
    _

// kernel: autoencoder_forward.7
$region0: #{autoencoder_forward.7}
  #allocation0 [shape = 'u32[]', space=smem, size = 0x4, offset = 0x4, fixed_abs, tag = 'smem constant byte address 0x4 - core index']
  #allocation1 [shape = 'u32[72,128]{1,0:T(1,128)}', space=vmem, size = 0x9000, scoped, tag = 'internal scratch']
  %s0 = inlined_call_operand.vmem [shape: f32[24,192], index: 0, kind: input, shape index: {}]
  %s1 = inlined_call_operand.vmem [shape: f32[192,128], index: 1, kind: input, shape index: {}]
  %s2 = inlined_call_operand.vmem [shape: f32[24,1], index: 2, kind: input, shape index: {}]
  %s3 = inlined_call_operand.vmem [shape: f32[24,128], index: 3, kind: output, shape index: {}]
  %s4 = sld [smem:[#allocation0]]
  $region22: #{autoencoder_forward.7} parent=0
    _
  %s6 = ssub.s32 1, %s4
  %s7 = scalar_select 0, %s6, %s4
  // Predicated region
  $region2: #{autoencoder_forward.7} parent=0 // pred_check
    _
  $region3: #{autoencoder_forward.7} parent=0 // pred_check_branch
    %9 = sbr.rel (0) target = $region5
  $region4: #{autoencoder_forward.7} parent=0 // pred_region
    _
  $region5: #{autoencoder_forward.7} parent=0 // pred_fallthru
    _
  // Predicated region
  $region6: #{autoencoder_forward.7} parent=0 // pred_check
    _
  $region7: #{autoencoder_forward.7} parent=0 // pred_check_branch
    %11 = sbr.rel (0) target = $region9
  $region8: #{autoencoder_forward.7} parent=0 // pred_region
    _
  $region9: #{autoencoder_forward.7} parent=0 // pred_fallthru
    _
  // Predicated region
  $region10: #{autoencoder_forward.7} parent=0 // pred_check
    _
  $region11: #{autoencoder_forward.7} parent=0 // pred_check_branch
    %13 = sbr.rel (0) target = $region13
  $region12: #{autoencoder_forward.7} parent=0 // pred_region
    _
  $region13: #{autoencoder_forward.7} parent=0 // pred_fallthru
    _
  %v15 = vld [vmem:[%s0] sm:$0xff]
  %v16 = vld [vmem:[%s0 + $0x8] sm:$0xff]
  %v17 = vld [vmem:[%s0 + $0x10] sm:$0xff]
  %v18 = vld [vmem:[%s0 + $0x18] sm:$0xff]
  %v19 = vld [vmem:[%s0 + $0x20] sm:$0xff]
  %v20 = vld [vmem:[%s0 + $0x28] sm:$0xff]
  %v21 = vpack.c.bf16 %v17, %v15
  %v22 = vpack.c.bf16 %v18, %v16
  %v23 = vpack.c.bf16 %v19, %v19
  %v24 = vpack.c.bf16 %v20, %v20
  %v25 = vld [vmem:[%s1] sm:$0xff]
  %v26 = vld [vmem:[%s1 + $0x8] sm:$0xff]
  %v27 = vld [vmem:[%s1 + $0x10] sm:$0xff]
  %v28 = vld [vmem:[%s1 + $0x18] sm:$0xff]
  %v29 = vld [vmem:[%s1 + $0x20] sm:$0xff]
  %v30 = vld [vmem:[%s1 + $0x28] sm:$0xff]
  %v31 = vld [vmem:[%s1 + $0x30] sm:$0xff]
  %v32 = vld [vmem:[%s1 + $0x38] sm:$0xff]
  %v33 = vld [vmem:[%s1 + $0x40] sm:$0xff]
  %v34 = vld [vmem:[%s1 + $0x48] sm:$0xff]
  %v35 = vld [vmem:[%s1 + $0x50] sm:$0xff]
  %v36 = vld [vmem:[%s1 + $0x58] sm:$0xff]
  %v37 = vld [vmem:[%s1 + $0x60] sm:$0xff]
  %v38 = vld [vmem:[%s1 + $0x68] sm:$0xff]
  %v39 = vld [vmem:[%s1 + $0x70] sm:$0xff]
  %v40 = vld [vmem:[%s1 + $0x78] sm:$0xff]
  %v41 = vld [vmem:[%s1 + $0x80] sm:$0xff]
  %v42 = vld [vmem:[%s1 + $0x88] sm:$0xff]
  %v43 = vld [vmem:[%s1 + $0x90] sm:$0xff]
  %v44 = vld [vmem:[%s1 + $0x98] sm:$0xff]
  %v45 = vld [vmem:[%s1 + $0xa0] sm:$0xff]
  %v46 = vld [vmem:[%s1 + $0xa8] sm:$0xff]
  %v47 = vld [vmem:[%s1 + $0xb0] sm:$0xff]
  %v48 = vld [vmem:[%s1 + $0xb8] sm:$0xff]
  %v49 = vpack.c.bf16 %v26, %v25
  %v50 = vpack.c.bf16 %v28, %v27
  %v51 = vpack.c.bf16 %v30, %v29
  %v52 = vpack.c.bf16 %v32, %v31
  %v53 = vpack.c.bf16 %v34, %v33
  %v54 = vpack.c.bf16 %v36, %v35
  %v55 = vpack.c.bf16 %v38, %v37
  %v56 = vpack.c.bf16 %v40, %v39
  %v57 = vpack.c.bf16 %v42, %v41
  %v58 = vpack.c.bf16 %v44, %v43
  %v59 = vpack.c.bf16 %v46, %v45
  %v60 = vpack.c.bf16 %v48, %v47
  %v61 = vld [vmem:[%s2] sm:$0xff]
  %v62 = vld [vmem:[%s2 + $0x8] sm:$0xff]
  %v63 = vld [vmem:[%s2 + $0x10] sm:$0xff]
  %65 = vset.pattern.permute.xlu0 0
  %66 = vperm.xlu0 %65, %v61
  %v67 = vpop.permute.xlu0 %66
  %70 = vset.pattern.permute.xlu0 0
  %71 = vperm.xlu0 %70, %v62
  %v72 = vpop.permute.xlu0 %71
  %75 = vset.pattern.permute.xlu0 0
  %76 = vperm.xlu0 %75, %v63
  %v77 = vpop.permute.xlu0 %76
  %vm79 = vcmask 523264
  %v81 = vsel %vm79, %v22, 0
  %v84 = vsel %vm79, %v24, 0
  %86 = vmatpush.bf16.msra.mxu0 %v56
  %87 = vmatpush.bf16.msra.mxu0 %v55
  %88 = vmatpush.bf16.msra.mxu0 %v54
  %89 = vmatpush.bf16.msra.mxu0 %v53
  %90 = vmatpush.bf16.msra.mxu0 %v52
  %91 = vmatpush.bf16.msra.mxu0 %v51
  %92 = vmatpush.bf16.msra.mxu0 %v50
  %93 = vmatpush.bf16.msra.mxu0 %v49
  %94 = vmatmul.bf16.gmra.mxu0 %v21
  %v95 = vpop.f32.mrf.mxu0
  %v96 = vadd.f32 %v67, %v95
  %v97 = vpop.f32.mrf.mxu0
  %v98 = vadd.f32 %v72, %v97
  %99 = vmatmul.bf16.gmra.mxu0 %v23
  %v100 = vpop.f32.mrf.mxu0
  %v101 = vadd.f32 %v77, %v100
  %v102 = vpop.f32.mrf.mxu0
  %103 = vdwg.mxu0
  %104 = vmatpush.bf16.msra.mxu0 0
  %105 = vmatpush.bf16.msra.mxu0 0
  %106 = vmatpush.bf16.msra.mxu0 0
  %107 = vmatpush.bf16.msra.mxu0 0
  %108 = vmatpush.bf16.msra.mxu0 %v60
  %109 = vmatpush.bf16.msra.mxu0 %v59
  %110 = vmatpush.bf16.msra.mxu0 %v58
  %111 = vmatpush.bf16.msra.mxu0 %v57
  %112 = vmatmul.bf16.gmra.mxu0 %v81
  %v113 = vpop.f32.mrf.mxu0
  %v114 = vadd.f32 %v96, %v113
  %v115 = vpop.f32.mrf.mxu0
  %v116 = vadd.f32 %v98, %v115
  %117 = vmatmul.bf16.gmra.mxu0 %v84
  %v118 = vpop.f32.mrf.mxu0
  %v119 = vadd.f32 %v101, %v118
  %v120 = vpop.f32.mrf.mxu0
  %121 = vdwg.mxu0
  %v122 = vmax.f32 %v114, 0.0
  %v123 = vmax.f32 %v116, 0.0
  %v124 = vmax.f32 %v119, 0.0
  %125 = vst [vmem:[%s3] sm:$0xff] %v122
  %126 = vst [vmem:[%s3 + $0x8] sm:$0xff] %v123
  %127 = vst [vmem:[%s3 + $0x10] sm:$0xff] %v124
  // Predicated region
  $region14: #{autoencoder_forward.7} parent=0 // pred_check
    _
  $region15: #{autoencoder_forward.7} parent=0 // pred_check_branch
    %129 = sbr.rel (0) target = $region17
  $region16: #{autoencoder_forward.7} parent=0 // pred_region
    _
  $region17: #{autoencoder_forward.7} parent=0 // pred_fallthru
    _
  // Predicated region
  $region18: #{autoencoder_forward.7} parent=0 // pred_check
    _
  $region19: #{autoencoder_forward.7} parent=0 // pred_check_branch
    %131 = sbr.rel (0) target = $region21
  $region20: #{autoencoder_forward.7} parent=0 // pred_region
    _
  $region21: #{autoencoder_forward.7} parent=0 // pred_fallthru
    _

// kernel: autoencoder_forward.8
$region0: #{autoencoder_forward.8}
  #allocation0 [shape = 'u32[]', space=smem, size = 0x4, offset = 0x4, fixed_abs, tag = 'smem constant byte address 0x4 - core index']
  #allocation1 [shape = 'u32[72,128]{1,0:T(1,128)}', space=vmem, size = 0x9000, scoped, tag = 'internal scratch']
  %s0 = inlined_call_operand.vmem [shape: f32[48,384], index: 0, kind: input, shape index: {}]
  %s1 = inlined_call_operand.vmem [shape: f32[384,128], index: 1, kind: input, shape index: {}]
  %s2 = inlined_call_operand.vmem [shape: f32[48,1], index: 2, kind: input, shape index: {}]
  %s3 = inlined_call_operand.vmem [shape: f32[48,128], index: 3, kind: output, shape index: {}]
  %s4 = sld [smem:[#allocation0]]
  $region22: #{autoencoder_forward.8} parent=0
    _
  %s6 = ssub.s32 1, %s4
  %s7 = scalar_select 0, %s6, %s4
  // Predicated region
  $region2: #{autoencoder_forward.8} parent=0 // pred_check
    _
  $region3: #{autoencoder_forward.8} parent=0 // pred_check_branch
    %9 = sbr.rel (0) target = $region5
  $region4: #{autoencoder_forward.8} parent=0 // pred_region
    _
  $region5: #{autoencoder_forward.8} parent=0 // pred_fallthru
    _
  // Predicated region
  $region6: #{autoencoder_forward.8} parent=0 // pred_check
    _
  $region7: #{autoencoder_forward.8} parent=0 // pred_check_branch
    %11 = sbr.rel (0) target = $region9
  $region8: #{autoencoder_forward.8} parent=0 // pred_region
    _
  $region9: #{autoencoder_forward.8} parent=0 // pred_fallthru
    _
  // Predicated region
  $region10: #{autoencoder_forward.8} parent=0 // pred_check
    _
  $region11: #{autoencoder_forward.8} parent=0 // pred_check_branch
    %13 = sbr.rel (0) target = $region13
  $region12: #{autoencoder_forward.8} parent=0 // pred_region
    _
  $region13: #{autoencoder_forward.8} parent=0 // pred_fallthru
    _
  %v14 = vld [vmem:[%s0] sm:$0xff]
  %v15 = vld [vmem:[%s0 + $0x8] sm:$0xff]
  %v16 = vld [vmem:[%s0 + $0x10] sm:$0xff]
  %v17 = vld [vmem:[%s0 + $0x18] sm:$0xff]
  %v18 = vld [vmem:[%s0 + $0x20] sm:$0xff]
  %v19 = vld [vmem:[%s0 + $0x28] sm:$0xff]
  %v20 = vld [vmem:[%s0 + $0x30] sm:$0xff]
  %v21 = vld [vmem:[%s0 + $0x38] sm:$0xff]
  %v22 = vld [vmem:[%s0 + $0x40] sm:$0xff]
  %v23 = vld [vmem:[%s0 + $0x48] sm:$0xff]
  %v24 = vld [vmem:[%s0 + $0x50] sm:$0xff]
  %v25 = vld [vmem:[%s0 + $0x58] sm:$0xff]
  %v26 = vld [vmem:[%s0 + $0x60] sm:$0xff]
  %v27 = vld [vmem:[%s0 + $0x68] sm:$0xff]
  %v28 = vld [vmem:[%s0 + $0x70] sm:$0xff]
  %v29 = vld [vmem:[%s0 + $0x78] sm:$0xff]
  %v30 = vld [vmem:[%s0 + $0x80] sm:$0xff]
  %v31 = vld [vmem:[%s0 + $0x88] sm:$0xff]
  %v32 = vpack.c.bf16 %v17, %v14
  %v33 = vpack.c.bf16 %v18, %v15
  %v34 = vpack.c.bf16 %v19, %v16
  %v35 = vpack.c.bf16 %v23, %v20
  %v36 = vpack.c.bf16 %v24, %v21
  %v37 = vpack.c.bf16 %v25, %v22
  %v38 = vpack.c.bf16 %v29, %v26
  %v39 = vpack.c.bf16 %v30, %v27
  %v40 = vpack.c.bf16 %v31, %v28
  %v41 = vld [vmem:[%s1] sm:$0xff]
  %v42 = vld [vmem:[%s1 + $0x8] sm:$0xff]
  %v43 = vld [vmem:[%s1 + $0x10] sm:$0xff]
  %v44 = vld [vmem:[%s1 + $0x18] sm:$0xff]
  %v45 = vld [vmem:[%s1 + $0x20] sm:$0xff]
  %v46 = vld [vmem:[%s1 + $0x28] sm:$0xff]
  %v47 = vld [vmem:[%s1 + $0x30] sm:$0xff]
  %v48 = vld [vmem:[%s1 + $0x38] sm:$0xff]
  %v49 = vld [vmem:[%s1 + $0x40] sm:$0xff]
  %v50 = vld [vmem:[%s1 + $0x48] sm:$0xff]
  %v51 = vld [vmem:[%s1 + $0x50] sm:$0xff]
  %v52 = vld [vmem:[%s1 + $0x58] sm:$0xff]
  %v53 = vld [vmem:[%s1 + $0x60] sm:$0xff]
  %v54 = vld [vmem:[%s1 + $0x68] sm:$0xff]
  %v55 = vld [vmem:[%s1 + $0x70] sm:$0xff]
  %v56 = vld [vmem:[%s1 + $0x78] sm:$0xff]
  %v57 = vld [vmem:[%s1 + $0x80] sm:$0xff]
  %v58 = vld [vmem:[%s1 + $0x88] sm:$0xff]
  %v59 = vld [vmem:[%s1 + $0x90] sm:$0xff]
  %v60 = vld [vmem:[%s1 + $0x98] sm:$0xff]
  %v61 = vld [vmem:[%s1 + $0xa0] sm:$0xff]
  %v62 = vld [vmem:[%s1 + $0xa8] sm:$0xff]
  %v63 = vld [vmem:[%s1 + $0xb0] sm:$0xff]
  %v64 = vld [vmem:[%s1 + $0xb8] sm:$0xff]
  %v65 = vld [vmem:[%s1 + $0xc0] sm:$0xff]
  %v66 = vld [vmem:[%s1 + $0xc8] sm:$0xff]
  %v67 = vld [vmem:[%s1 + $0xd0] sm:$0xff]
  %v68 = vld [vmem:[%s1 + $0xd8] sm:$0xff]
  %v69 = vld [vmem:[%s1 + $0xe0] sm:$0xff]
  %v70 = vld [vmem:[%s1 + $0xe8] sm:$0xff]
  %v71 = vld [vmem:[%s1 + $0xf0] sm:$0xff]
  %v72 = vld [vmem:[%s1 + $0xf8] sm:$0xff]
  %v73 = vld [vmem:[%s1 + $0x100] sm:$0xff]
  %v74 = vld [vmem:[%s1 + $0x108] sm:$0xff]
  %v75 = vld [vmem:[%s1 + $0x110] sm:$0xff]
  %v76 = vld [vmem:[%s1 + $0x118] sm:$0xff]
  %v77 = vld [vmem:[%s1 + $0x120] sm:$0xff]
  %v78 = vld [vmem:[%s1 + $0x128] sm:$0xff]
  %v79 = vld [vmem:[%s1 + $0x130] sm:$0xff]
  %v80 = vld [vmem:[%s1 + $0x138] sm:$0xff]
  %v81 = vld [vmem:[%s1 + $0x140] sm:$0xff]
  %v82 = vld [vmem:[%s1 + $0x148] sm:$0xff]
  %v83 = vld [vmem:[%s1 + $0x150] sm:$0xff]
  %v84 = vld [vmem:[%s1 + $0x158] sm:$0xff]
  %v85 = vld [vmem:[%s1 + $0x160] sm:$0xff]
  %v86 = vld [vmem:[%s1 + $0x168] sm:$0xff]
  %v87 = vld [vmem:[%s1 + $0x170] sm:$0xff]
  %v88 = vld [vmem:[%s1 + $0x178] sm:$0xff]
  %v89 = vpack.c.bf16 %v42, %v41
  %v90 = vpack.c.bf16 %v44, %v43
  %v91 = vpack.c.bf16 %v46, %v45
  %v92 = vpack.c.bf16 %v48, %v47
  %v93 = vpack.c.bf16 %v50, %v49
  %v94 = vpack.c.bf16 %v52, %v51
  %v95 = vpack.c.bf16 %v54, %v53
  %v96 = vpack.c.bf16 %v56, %v55
  %v97 = vpack.c.bf16 %v58, %v57
  %v98 = vpack.c.bf16 %v60, %v59
  %v99 = vpack.c.bf16 %v62, %v61
  %v100 = vpack.c.bf16 %v64, %v63
  %v101 = vpack.c.bf16 %v66, %v65
  %v102 = vpack.c.bf16 %v68, %v67
  %v103 = vpack.c.bf16 %v70, %v69
  %v104 = vpack.c.bf16 %v72, %v71
  %v105 = vpack.c.bf16 %v74, %v73
  %v106 = vpack.c.bf16 %v76, %v75
  %v107 = vpack.c.bf16 %v78, %v77
  %v108 = vpack.c.bf16 %v80, %v79
  %v109 = vpack.c.bf16 %v82, %v81
  %v110 = vpack.c.bf16 %v84, %v83
  %v111 = vpack.c.bf16 %v86, %v85
  %v112 = vpack.c.bf16 %v88, %v87
  %v113 = vld [vmem:[%s2] sm:$0xff]
  %v114 = vld [vmem:[%s2 + $0x8] sm:$0xff]
  %v115 = vld [vmem:[%s2 + $0x10] sm:$0xff]
  %v116 = vld [vmem:[%s2 + $0x18] sm:$0xff]
  %v117 = vld [vmem:[%s2 + $0x20] sm:$0xff]
  %v118 = vld [vmem:[%s2 + $0x28] sm:$0xff]
  %120 = vset.pattern.permute.xlu0 0
  %121 = vperm.xlu0 %120, %v113
  %v122 = vpop.permute.xlu0 %121
  %125 = vset.pattern.permute.xlu0 0
  %126 = vperm.xlu0 %125, %v114
  %v127 = vpop.permute.xlu0 %126
  %130 = vset.pattern.permute.xlu0 0
  %131 = vperm.xlu0 %130, %v115
  %v132 = vpop.permute.xlu0 %131
  %135 = vset.pattern.permute.xlu0 0
  %136 = vperm.xlu0 %135, %v116
  %v137 = vpop.permute.xlu0 %136
  %140 = vset.pattern.permute.xlu0 0
  %141 = vperm.xlu0 %140, %v117
  %v142 = vpop.permute.xlu0 %141
  %145 = vset.pattern.permute.xlu0 0
  %146 = vperm.xlu0 %145, %v118
  %v147 = vpop.permute.xlu0 %146
  %149 = vmatpush.bf16.msra.mxu0 %v96
  %150 = vmatpush.bf16.msra.mxu0 %v95
  %151 = vmatpush.bf16.msra.mxu0 %v94
  %152 = vmatpush.bf16.msra.mxu0 %v93
  %153 = vmatpush.bf16.msra.mxu0 %v92
  %154 = vmatpush.bf16.msra.mxu0 %v91
  %155 = vmatpush.bf16.msra.mxu0 %v90
  %156 = vmatpush.bf16.msra.mxu0 %v89
  %157 = vmatmul.bf16.gmra.mxu0 %v32
  %v158 = vpop.f32.mrf.mxu0
  %v159 = vadd.f32 %v122, %v158
  %v160 = vpop.f32.mrf.mxu0
  %v161 = vadd.f32 %v127, %v160
  %162 = vmatmul.bf16.gmra.mxu0 %v35
  %v163 = vpop.f32.mrf.mxu0
  %v164 = vadd.f32 %v132, %v163
  %v165 = vpop.f32.mrf.mxu0
  %v166 = vadd.f32 %v137, %v165
  %167 = vmatmul.bf16.gmra.mxu0 %v38
  %v168 = vpop.f32.mrf.mxu0
  %v169 = vadd.f32 %v142, %v168
  %v170 = vpop.f32.mrf.mxu0
  %v171 = vadd.f32 %v147, %v170
  %172 = vdwg.mxu0
  %173 = vmatpush.bf16.msra.mxu0 %v104
  %174 = vmatpush.bf16.msra.mxu0 %v103
  %175 = vmatpush.bf16.msra.mxu0 %v102
  %176 = vmatpush.bf16.msra.mxu0 %v101
  %177 = vmatpush.bf16.msra.mxu0 %v100
  %178 = vmatpush.bf16.msra.mxu0 %v99
  %179 = vmatpush.bf16.msra.mxu0 %v98
  %180 = vmatpush.bf16.msra.mxu0 %v97
  %181 = vmatmul.bf16.gmra.mxu0 %v33
  %v182 = vpop.f32.mrf.mxu0
  %v183 = vadd.f32 %v159, %v182
  %v184 = vpop.f32.mrf.mxu0
  %v185 = vadd.f32 %v161, %v184
  %186 = vmatmul.bf16.gmra.mxu0 %v36
  %v187 = vpop.f32.mrf.mxu0
  %v188 = vadd.f32 %v164, %v187
  %v189 = vpop.f32.mrf.mxu0
  %v190 = vadd.f32 %v166, %v189
  %191 = vmatmul.bf16.gmra.mxu0 %v39
  %v192 = vpop.f32.mrf.mxu0
  %v193 = vadd.f32 %v169, %v192
  %v194 = vpop.f32.mrf.mxu0
  %v195 = vadd.f32 %v171, %v194
  %196 = vdwg.mxu0
  %197 = vmatpush.bf16.msra.mxu0 %v112
  %198 = vmatpush.bf16.msra.mxu0 %v111
  %199 = vmatpush.bf16.msra.mxu0 %v110
  %200 = vmatpush.bf16.msra.mxu0 %v109
  %201 = vmatpush.bf16.msra.mxu0 %v108
  %202 = vmatpush.bf16.msra.mxu0 %v107
  %203 = vmatpush.bf16.msra.mxu0 %v106
  %204 = vmatpush.bf16.msra.mxu0 %v105
  %205 = vmatmul.bf16.gmra.mxu0 %v34
  %v206 = vpop.f32.mrf.mxu0
  %v207 = vadd.f32 %v183, %v206
  %v208 = vpop.f32.mrf.mxu0
  %v209 = vadd.f32 %v185, %v208
  %210 = vmatmul.bf16.gmra.mxu0 %v37
  %v211 = vpop.f32.mrf.mxu0
  %v212 = vadd.f32 %v188, %v211
  %v213 = vpop.f32.mrf.mxu0
  %v214 = vadd.f32 %v190, %v213
  %215 = vmatmul.bf16.gmra.mxu0 %v40
  %v216 = vpop.f32.mrf.mxu0
  %v217 = vadd.f32 %v193, %v216
  %v218 = vpop.f32.mrf.mxu0
  %v219 = vadd.f32 %v195, %v218
  %220 = vdwg.mxu0
  %v221 = vmax.f32 %v207, 0.0
  %v222 = vmax.f32 %v209, 0.0
  %v223 = vmax.f32 %v212, 0.0
  %v224 = vmax.f32 %v214, 0.0
  %v225 = vmax.f32 %v217, 0.0
  %v226 = vmax.f32 %v219, 0.0
  %227 = vst [vmem:[%s3] sm:$0xff] %v221
  %228 = vst [vmem:[%s3 + $0x8] sm:$0xff] %v222
  %229 = vst [vmem:[%s3 + $0x10] sm:$0xff] %v223
  %230 = vst [vmem:[%s3 + $0x18] sm:$0xff] %v224
  %231 = vst [vmem:[%s3 + $0x20] sm:$0xff] %v225
  %232 = vst [vmem:[%s3 + $0x28] sm:$0xff] %v226
  // Predicated region
  $region14: #{autoencoder_forward.8} parent=0 // pred_check
    _
  $region15: #{autoencoder_forward.8} parent=0 // pred_check_branch
    %234 = sbr.rel (0) target = $region17
  $region16: #{autoencoder_forward.8} parent=0 // pred_region
    _
  $region17: #{autoencoder_forward.8} parent=0 // pred_fallthru
    _
  // Predicated region
  $region18: #{autoencoder_forward.8} parent=0 // pred_check
    _
  $region19: #{autoencoder_forward.8} parent=0 // pred_check_branch
    %236 = sbr.rel (0) target = $region21
  $region20: #{autoencoder_forward.8} parent=0 // pred_region
    _
  $region21: #{autoencoder_forward.8} parent=0 // pred_fallthru
    _

// kernel: tile.18
$region0: #{tile.18}
  #allocation0 [shape = 's32[1]{0}', space=sflag, size = 0x4, scoped, tag = 'scoped memory for tile.18']
  %s0 = inlined_call_operand.vmem [shape: f32[24], index: 0, kind: input, shape index: {}]
  %s1 = inlined_call_operand.vmem [shape: f32[4,24], index: 1, kind: output, shape index: {}]
  // Predicated region
  $region2: #{tile.18} parent=0 // pred_check
    _
  $region3: #{tile.18} parent=0 // pred_check_branch
    %3 = sbr.rel (0) target = $region5
  $region4: #{tile.18} parent=0 // pred_region
    _
  $region5: #{tile.18} parent=0 // pred_fallthru
    _
  %v4 = vld [vmem:[%s0] ss:$0 sm:$0xff]
  %5 = vst [vmem:[%s1] sm:$0xf] %v4

// kernel: autoencoder_forward.9
$region0: #{autoencoder_forward.9}
  #allocation0 [shape = 'u32[]', space=smem, size = 0x4, offset = 0x4, fixed_abs, tag = 'smem constant byte address 0x4 - core index']
  #allocation1 [shape = 'u32[72,128]{1,0:T(1,128)}', space=vmem, size = 0x9000, scoped, tag = 'internal scratch']
  %s0 = inlined_call_operand.vmem [shape: f32[96,432], index: 0, kind: input, shape index: {}]
  %s1 = inlined_call_operand.vmem [shape: f32[432,128], index: 1, kind: input, shape index: {}]
  %s2 = inlined_call_operand.vmem [shape: f32[96,1], index: 2, kind: input, shape index: {}]
  %s3 = inlined_call_operand.vmem [shape: f32[96,128], index: 3, kind: output, shape index: {}]
  %s4 = sld [smem:[#allocation0]]
  $region22: #{autoencoder_forward.9} parent=0
    _
  %s6 = ssub.s32 1, %s4
  %s7 = scalar_select 0, %s6, %s4
  // Predicated region
  $region2: #{autoencoder_forward.9} parent=0 // pred_check
    _
  $region3: #{autoencoder_forward.9} parent=0 // pred_check_branch
    %9 = sbr.rel (0) target = $region5
  $region4: #{autoencoder_forward.9} parent=0 // pred_region
    _
  $region5: #{autoencoder_forward.9} parent=0 // pred_fallthru
    _
  // Predicated region
  $region6: #{autoencoder_forward.9} parent=0 // pred_check
    _
  $region7: #{autoencoder_forward.9} parent=0 // pred_check_branch
    %11 = sbr.rel (0) target = $region9
  $region8: #{autoencoder_forward.9} parent=0 // pred_region
    _
  $region9: #{autoencoder_forward.9} parent=0 // pred_fallthru
    _
  // Predicated region
  $region10: #{autoencoder_forward.9} parent=0 // pred_check
    _
  $region11: #{autoencoder_forward.9} parent=0 // pred_check_branch
    %13 = sbr.rel (0) target = $region13
  $region12: #{autoencoder_forward.9} parent=0 // pred_region
    _
  $region13: #{autoencoder_forward.9} parent=0 // pred_fallthru
    _
  %v15 = vld [vmem:[%s0] sm:$0xff]
  %v16 = vld [vmem:[%s0 + $0x8] sm:$0xff]
  %v17 = vld [vmem:[%s0 + $0x10] sm:$0xff]
  %v18 = vld [vmem:[%s0 + $0x18] sm:$0xff]
  %v19 = vld [vmem:[%s0 + $0x20] sm:$0xff]
  %v20 = vld [vmem:[%s0 + $0x28] sm:$0xff]
  %v21 = vld [vmem:[%s0 + $0x30] sm:$0xff]
  %v22 = vld [vmem:[%s0 + $0x38] sm:$0xff]
  %v23 = vld [vmem:[%s0 + $0x40] sm:$0xff]
  %v24 = vld [vmem:[%s0 + $0x48] sm:$0xff]
  %v25 = vld [vmem:[%s0 + $0x50] sm:$0xff]
  %v26 = vld [vmem:[%s0 + $0x58] sm:$0xff]
  %v27 = vld [vmem:[%s0 + $0x60] sm:$0xff]
  %v28 = vld [vmem:[%s0 + $0x68] sm:$0xff]
  %v29 = vld [vmem:[%s0 + $0x70] sm:$0xff]
  %v30 = vld [vmem:[%s0 + $0x78] sm:$0xff]
  %v31 = vld [vmem:[%s0 + $0x80] sm:$0xff]
  %v32 = vld [vmem:[%s0 + $0x88] sm:$0xff]
  %v33 = vld [vmem:[%s0 + $0x90] sm:$0xff]
  %v34 = vld [vmem:[%s0 + $0x98] sm:$0xff]
  %v35 = vld [vmem:[%s0 + $0xa0] sm:$0xff]
  %v36 = vld [vmem:[%s0 + $0xa8] sm:$0xff]
  %v37 = vld [vmem:[%s0 + $0xb0] sm:$0xff]
  %v38 = vld [vmem:[%s0 + $0xb8] sm:$0xff]
  %v39 = vld [vmem:[%s0 + $0xc0] sm:$0xff]
  %v40 = vld [vmem:[%s0 + $0xc8] sm:$0xff]
  %v41 = vld [vmem:[%s0 + $0xd0] sm:$0xff]
  %v42 = vld [vmem:[%s0 + $0xd8] sm:$0xff]
  %v43 = vld [vmem:[%s0 + $0xe0] sm:$0xff]
  %v44 = vld [vmem:[%s0 + $0xe8] sm:$0xff]
  %v45 = vld [vmem:[%s0 + $0xf0] sm:$0xff]
  %v46 = vld [vmem:[%s0 + $0xf8] sm:$0xff]
  %v47 = vld [vmem:[%s0 + $0x100] sm:$0xff]
  %v48 = vld [vmem:[%s0 + $0x108] sm:$0xff]
  %v49 = vld [vmem:[%s0 + $0x110] sm:$0xff]
  %v50 = vld [vmem:[%s0 + $0x118] sm:$0xff]
  %v51 = vld [vmem:[%s0 + $0x120] sm:$0xff]
  %v52 = vld [vmem:[%s0 + $0x128] sm:$0xff]
  %v53 = vld [vmem:[%s0 + $0x130] sm:$0xff]
  %v54 = vld [vmem:[%s0 + $0x138] sm:$0xff]
  %v55 = vld [vmem:[%s0 + $0x140] sm:$0xff]
  %v56 = vld [vmem:[%s0 + $0x148] sm:$0xff]
  %v57 = vld [vmem:[%s0 + $0x150] sm:$0xff]
  %v58 = vld [vmem:[%s0 + $0x158] sm:$0xff]
  %v59 = vld [vmem:[%s0 + $0x160] sm:$0xff]
  %v60 = vld [vmem:[%s0 + $0x168] sm:$0xff]
  %v61 = vld [vmem:[%s0 + $0x170] sm:$0xff]
  %v62 = vld [vmem:[%s0 + $0x178] sm:$0xff]
  %v63 = vpack.c.bf16 %v19, %v15
  %v64 = vpack.c.bf16 %v20, %v16
  %v65 = vpack.c.bf16 %v21, %v17
  %v66 = vpack.c.bf16 %v22, %v18
  %v67 = vpack.c.bf16 %v27, %v23
  %v68 = vpack.c.bf16 %v28, %v24
  %v69 = vpack.c.bf16 %v29, %v25
  %v70 = vpack.c.bf16 %v30, %v26
  %v71 = vpack.c.bf16 %v35, %v31
  %v72 = vpack.c.bf16 %v36, %v32
  %v73 = vpack.c.bf16 %v37, %v33
  %v74 = vpack.c.bf16 %v38, %v34
  %v75 = vpack.c.bf16 %v43, %v39
  %v76 = vpack.c.bf16 %v44, %v40
  %v77 = vpack.c.bf16 %v45, %v41
  %v78 = vpack.c.bf16 %v46, %v42
  %v79 = vpack.c.bf16 %v51, %v47
  %v80 = vpack.c.bf16 %v52, %v48
  %v81 = vpack.c.bf16 %v53, %v49
  %v82 = vpack.c.bf16 %v54, %v50
  %v83 = vpack.c.bf16 %v59, %v55
  %v84 = vpack.c.bf16 %v60, %v56
  %v85 = vpack.c.bf16 %v61, %v57
  %v86 = vpack.c.bf16 %v62, %v58
  %v87 = vld [vmem:[%s1] sm:$0xff]
  %v88 = vld [vmem:[%s1 + $0x8] sm:$0xff]
  %v89 = vld [vmem:[%s1 + $0x10] sm:$0xff]
  %v90 = vld [vmem:[%s1 + $0x18] sm:$0xff]
  %v91 = vld [vmem:[%s1 + $0x20] sm:$0xff]
  %v92 = vld [vmem:[%s1 + $0x28] sm:$0xff]
  %v93 = vld [vmem:[%s1 + $0x30] sm:$0xff]
  %v94 = vld [vmem:[%s1 + $0x38] sm:$0xff]
  %v95 = vld [vmem:[%s1 + $0x40] sm:$0xff]
  %v96 = vld [vmem:[%s1 + $0x48] sm:$0xff]
  %v97 = vld [vmem:[%s1 + $0x50] sm:$0xff]
  %v98 = vld [vmem:[%s1 + $0x58] sm:$0xff]
  %v99 = vld [vmem:[%s1 + $0x60] sm:$0xff]
  %v100 = vld [vmem:[%s1 + $0x68] sm:$0xff]
  %v101 = vld [vmem:[%s1 + $0x70] sm:$0xff]
  %v102 = vld [vmem:[%s1 + $0x78] sm:$0xff]
  %v103 = vld [vmem:[%s1 + $0x80] sm:$0xff]
  %v104 = vld [vmem:[%s1 + $0x88] sm:$0xff]
  %v105 = vld [vmem:[%s1 + $0x90] sm:$0xff]
  %v106 = vld [vmem:[%s1 + $0x98] sm:$0xff]
  %v107 = vld [vmem:[%s1 + $0xa0] sm:$0xff]
  %v108 = vld [vmem:[%s1 + $0xa8] sm:$0xff]
  %v109 = vld [vmem:[%s1 + $0xb0] sm:$0xff]
  %v110 = vld [vmem:[%s1 + $0xb8] sm:$0xff]
  %v111 = vld [vmem:[%s1 + $0xc0] sm:$0xff]
  %v112 = vld [vmem:[%s1 + $0xc8] sm:$0xff]
  %v113 = vld [vmem:[%s1 + $0xd0] sm:$0xff]
  %v114 = vld [vmem:[%s1 + $0xd8] sm:$0xff]
  %v115 = vld [vmem:[%s1 + $0xe0] sm:$0xff]
  %v116 = vld [vmem:[%s1 + $0xe8] sm:$0xff]
  %v117 = vld [vmem:[%s1 + $0xf0] sm:$0xff]
  %v118 = vld [vmem:[%s1 + $0xf8] sm:$0xff]
  %v119 = vld [vmem:[%s1 + $0x100] sm:$0xff]
  %v120 = vld [vmem:[%s1 + $0x108] sm:$0xff]
  %v121 = vld [vmem:[%s1 + $0x110] sm:$0xff]
  %v122 = vld [vmem:[%s1 + $0x118] sm:$0xff]
  %v123 = vld [vmem:[%s1 + $0x120] sm:$0xff]
  %v124 = vld [vmem:[%s1 + $0x128] sm:$0xff]
  %v125 = vld [vmem:[%s1 + $0x130] sm:$0xff]
  %v126 = vld [vmem:[%s1 + $0x138] sm:$0xff]
  %v127 = vld [vmem:[%s1 + $0x140] sm:$0xff]
  %v128 = vld [vmem:[%s1 + $0x148] sm:$0xff]
  %v129 = vld [vmem:[%s1 + $0x150] sm:$0xff]
  %v130 = vld [vmem:[%s1 + $0x158] sm:$0xff]
  %v131 = vld [vmem:[%s1 + $0x160] sm:$0xff]
  %v132 = vld [vmem:[%s1 + $0x168] sm:$0xff]
  %v133 = vld [vmem:[%s1 + $0x170] sm:$0xff]
  %v134 = vld [vmem:[%s1 + $0x178] sm:$0xff]
  %v135 = vld [vmem:[%s1 + $0x180] sm:$0xff]
  %v136 = vld [vmem:[%s1 + $0x188] sm:$0xff]
  %v137 = vld [vmem:[%s1 + $0x190] sm:$0xff]
  %v138 = vld [vmem:[%s1 + $0x198] sm:$0xff]
  %v139 = vld [vmem:[%s1 + $0x1a0] sm:$0xff]
  %v140 = vld [vmem:[%s1 + $0x1a8] sm:$0xff]
  %v141 = vpack.c.bf16 %v88, %v87
  %v142 = vpack.c.bf16 %v90, %v89
  %v143 = vpack.c.bf16 %v92, %v91
  %v144 = vpack.c.bf16 %v94, %v93
  %v145 = vpack.c.bf16 %v96, %v95
  %v146 = vpack.c.bf16 %v98, %v97
  %v147 = vpack.c.bf16 %v100, %v99
  %v148 = vpack.c.bf16 %v102, %v101
  %v149 = vpack.c.bf16 %v104, %v103
  %v150 = vpack.c.bf16 %v106, %v105
  %v151 = vpack.c.bf16 %v108, %v107
  %v152 = vpack.c.bf16 %v110, %v109
  %v153 = vpack.c.bf16 %v112, %v111
  %v154 = vpack.c.bf16 %v114, %v113
  %v155 = vpack.c.bf16 %v116, %v115
  %v156 = vpack.c.bf16 %v118, %v117
  %v157 = vpack.c.bf16 %v120, %v119
  %v158 = vpack.c.bf16 %v122, %v121
  %v159 = vpack.c.bf16 %v124, %v123
  %v160 = vpack.c.bf16 %v126, %v125
  %v161 = vpack.c.bf16 %v128, %v127
  %v162 = vpack.c.bf16 %v130, %v129
  %v163 = vpack.c.bf16 %v132, %v131
  %v164 = vpack.c.bf16 %v134, %v133
  %v165 = vpack.c.bf16 %v136, %v135
  %v166 = vpack.c.bf16 %v138, %v137
  %v167 = vpack.c.bf16 %v140, %v139
  %v168 = vld [vmem:[%s2] sm:$0xff]
  %v169 = vld [vmem:[%s2 + $0x8] sm:$0xff]
  %v170 = vld [vmem:[%s2 + $0x10] sm:$0xff]
  %v171 = vld [vmem:[%s2 + $0x18] sm:$0xff]
  %v172 = vld [vmem:[%s2 + $0x20] sm:$0xff]
  %v173 = vld [vmem:[%s2 + $0x28] sm:$0xff]
  %v174 = vld [vmem:[%s2 + $0x30] sm:$0xff]
  %v175 = vld [vmem:[%s2 + $0x38] sm:$0xff]
  %v176 = vld [vmem:[%s2 + $0x40] sm:$0xff]
  %v177 = vld [vmem:[%s2 + $0x48] sm:$0xff]
  %v178 = vld [vmem:[%s2 + $0x50] sm:$0xff]
  %v179 = vld [vmem:[%s2 + $0x58] sm:$0xff]
  %181 = vset.pattern.permute.xlu0 0
  %182 = vperm.xlu0 %181, %v168
  %v183 = vpop.permute.xlu0 %182
  %186 = vset.pattern.permute.xlu0 0
  %187 = vperm.xlu0 %186, %v169
  %v188 = vpop.permute.xlu0 %187
  %191 = vset.pattern.permute.xlu0 0
  %192 = vperm.xlu0 %191, %v170
  %v193 = vpop.permute.xlu0 %192
  %196 = vset.pattern.permute.xlu0 0
  %197 = vperm.xlu0 %196, %v171
  %v198 = vpop.permute.xlu0 %197
  %201 = vset.pattern.permute.xlu0 0
  %202 = vperm.xlu0 %201, %v172
  %v203 = vpop.permute.xlu0 %202
  %206 = vset.pattern.permute.xlu0 0
  %207 = vperm.xlu0 %206, %v173
  %v208 = vpop.permute.xlu0 %207
  %211 = vset.pattern.permute.xlu0 0
  %212 = vperm.xlu0 %211, %v174
  %v213 = vpop.permute.xlu0 %212
  %216 = vset.pattern.permute.xlu0 0
  %217 = vperm.xlu0 %216, %v175
  %v218 = vpop.permute.xlu0 %217
  %221 = vset.pattern.permute.xlu0 0
  %222 = vperm.xlu0 %221, %v176
  %v223 = vpop.permute.xlu0 %222
  %226 = vset.pattern.permute.xlu0 0
  %227 = vperm.xlu0 %226, %v177
  %v228 = vpop.permute.xlu0 %227
  %231 = vset.pattern.permute.xlu0 0
  %232 = vperm.xlu0 %231, %v178
  %v233 = vpop.permute.xlu0 %232
  %236 = vset.pattern.permute.xlu0 0
  %237 = vperm.xlu0 %236, %v179
  %v238 = vpop.permute.xlu0 %237
  %vm240 = vcmask 392192
  %v242 = vsel %vm240, %v66, 0
  %v245 = vsel %vm240, %v70, 0
  %v248 = vsel %vm240, %v74, 0
  %v251 = vsel %vm240, %v78, 0
  %v254 = vsel %vm240, %v82, 0
  %v257 = vsel %vm240, %v86, 0
  %259 = vmatpush.bf16.msra.mxu0 %v148
  %260 = vmatpush.bf16.msra.mxu0 %v147
  %261 = vmatpush.bf16.msra.mxu0 %v146
  %262 = vmatpush.bf16.msra.mxu0 %v145
  %263 = vmatpush.bf16.msra.mxu0 %v144
  %264 = vmatpush.bf16.msra.mxu0 %v143
  %265 = vmatpush.bf16.msra.mxu0 %v142
  %266 = vmatpush.bf16.msra.mxu0 %v141
  %267 = vmatmul.bf16.gmra.mxu0 %v63
  %v268 = vpop.f32.mrf.mxu0
  %v269 = vadd.f32 %v183, %v268
  %v270 = vpop.f32.mrf.mxu0
  %v271 = vadd.f32 %v188, %v270
  %272 = vmatmul.bf16.gmra.mxu0 %v67
  %v273 = vpop.f32.mrf.mxu0
  %v274 = vadd.f32 %v193, %v273
  %v275 = vpop.f32.mrf.mxu0
  %v276 = vadd.f32 %v198, %v275
  %277 = vmatmul.bf16.gmra.mxu0 %v71
  %v278 = vpop.f32.mrf.mxu0
  %v279 = vadd.f32 %v203, %v278
  %v280 = vpop.f32.mrf.mxu0
  %v281 = vadd.f32 %v208, %v280
  %282 = vmatmul.bf16.gmra.mxu0 %v75
  %v283 = vpop.f32.mrf.mxu0
  %v284 = vadd.f32 %v213, %v283
  %v285 = vpop.f32.mrf.mxu0
  %v286 = vadd.f32 %v218, %v285
  %287 = vmatmul.bf16.gmra.mxu0 %v79
  %v288 = vpop.f32.mrf.mxu0
  %v289 = vadd.f32 %v223, %v288
  %v290 = vpop.f32.mrf.mxu0
  %v291 = vadd.f32 %v228, %v290
  %292 = vmatmul.bf16.gmra.mxu0 %v83
  %v293 = vpop.f32.mrf.mxu0
  %v294 = vadd.f32 %v233, %v293
  %v295 = vpop.f32.mrf.mxu0
  %v296 = vadd.f32 %v238, %v295
  %297 = vdwg.mxu0
  %298 = vmatpush.bf16.msra.mxu0 %v156
  %299 = vmatpush.bf16.msra.mxu0 %v155
  %300 = vmatpush.bf16.msra.mxu0 %v154
  %301 = vmatpush.bf16.msra.mxu0 %v153
  %302 = vmatpush.bf16.msra.mxu0 %v152
  %303 = vmatpush.bf16.msra.mxu0 %v151
  %304 = vmatpush.bf16.msra.mxu0 %v150
  %305 = vmatpush.bf16.msra.mxu0 %v149
  %306 = vmatmul.bf16.gmra.mxu0 %v64
  %v307 = vpop.f32.mrf.mxu0
  %v308 = vadd.f32 %v269, %v307
  %v309 = vpop.f32.mrf.mxu0
  %v310 = vadd.f32 %v271, %v309
  %311 = vmatmul.bf16.gmra.mxu0 %v68
  %v312 = vpop.f32.mrf.mxu0
  %v313 = vadd.f32 %v274, %v312
  %v314 = vpop.f32.mrf.mxu0
  %v315 = vadd.f32 %v276, %v314
  %316 = vmatmul.bf16.gmra.mxu0 %v72
  %v317 = vpop.f32.mrf.mxu0
  %v318 = vadd.f32 %v279, %v317
  %v319 = vpop.f32.mrf.mxu0
  %v320 = vadd.f32 %v281, %v319
  %321 = vmatmul.bf16.gmra.mxu0 %v76
  %v322 = vpop.f32.mrf.mxu0
  %v323 = vadd.f32 %v284, %v322
  %v324 = vpop.f32.mrf.mxu0
  %v325 = vadd.f32 %v286, %v324
  %326 = vmatmul.bf16.gmra.mxu0 %v80
  %v327 = vpop.f32.mrf.mxu0
  %v328 = vadd.f32 %v289, %v327
  %v329 = vpop.f32.mrf.mxu0
  %v330 = vadd.f32 %v291, %v329
  %331 = vmatmul.bf16.gmra.mxu0 %v84
  %v332 = vpop.f32.mrf.mxu0
  %v333 = vadd.f32 %v294, %v332
  %v334 = vpop.f32.mrf.mxu0
  %v335 = vadd.f32 %v296, %v334
  %336 = vdwg.mxu0
  %337 = vmatpush.bf16.msra.mxu0 %v164
  %338 = vmatpush.bf16.msra.mxu0 %v163
  %339 = vmatpush.bf16.msra.mxu0 %v162
  %340 = vmatpush.bf16.msra.mxu0 %v161
  %341 = vmatpush.bf16.msra.mxu0 %v160
  %342 = vmatpush.bf16.msra.mxu0 %v159
  %343 = vmatpush.bf16.msra.mxu0 %v158
  %344 = vmatpush.bf16.msra.mxu0 %v157
  %345 = vmatmul.bf16.gmra.mxu0 %v65
  %v346 = vpop.f32.mrf.mxu0
  %v347 = vadd.f32 %v308, %v346
  %v348 = vpop.f32.mrf.mxu0
  %v349 = vadd.f32 %v310, %v348
  %350 = vmatmul.bf16.gmra.mxu0 %v69
  %v351 = vpop.f32.mrf.mxu0
  %v352 = vadd.f32 %v313, %v351
  %v353 = vpop.f32.mrf.mxu0
  %v354 = vadd.f32 %v315, %v353
  %355 = vmatmul.bf16.gmra.mxu0 %v73
  %v356 = vpop.f32.mrf.mxu0
  %v357 = vadd.f32 %v318, %v356
  %v358 = vpop.f32.mrf.mxu0
  %v359 = vadd.f32 %v320, %v358
  %360 = vmatmul.bf16.gmra.mxu0 %v77
  %v361 = vpop.f32.mrf.mxu0
  %v362 = vadd.f32 %v323, %v361
  %v363 = vpop.f32.mrf.mxu0
  %v364 = vadd.f32 %v325, %v363
  %365 = vmatmul.bf16.gmra.mxu0 %v81
  %v366 = vpop.f32.mrf.mxu0
  %v367 = vadd.f32 %v328, %v366
  %v368 = vpop.f32.mrf.mxu0
  %v369 = vadd.f32 %v330, %v368
  %370 = vmatmul.bf16.gmra.mxu0 %v85
  %v371 = vpop.f32.mrf.mxu0
  %v372 = vadd.f32 %v333, %v371
  %v373 = vpop.f32.mrf.mxu0
  %v374 = vadd.f32 %v335, %v373
  %375 = vdwg.mxu0
  %376 = vmatpush.bf16.msra.mxu0 0
  %377 = vmatpush.bf16.msra.mxu0 0
  %378 = vmatpush.bf16.msra.mxu0 0
  %379 = vmatpush.bf16.msra.mxu0 0
  %380 = vmatpush.bf16.msra.mxu0 0
  %381 = vmatpush.bf16.msra.mxu0 %v167
  %382 = vmatpush.bf16.msra.mxu0 %v166
  %383 = vmatpush.bf16.msra.mxu0 %v165
  %384 = vmatmul.bf16.gmra.mxu0 %v242
  %v385 = vpop.f32.mrf.mxu0
  %v386 = vadd.f32 %v347, %v385
  %v387 = vpop.f32.mrf.mxu0
  %v388 = vadd.f32 %v349, %v387
  %389 = vmatmul.bf16.gmra.mxu0 %v245
  %v390 = vpop.f32.mrf.mxu0
  %v391 = vadd.f32 %v352, %v390
  %v392 = vpop.f32.mrf.mxu0
  %v393 = vadd.f32 %v354, %v392
  %394 = vmatmul.bf16.gmra.mxu0 %v248
  %v395 = vpop.f32.mrf.mxu0
  %v396 = vadd.f32 %v357, %v395
  %v397 = vpop.f32.mrf.mxu0
  %v398 = vadd.f32 %v359, %v397
  %399 = vmatmul.bf16.gmra.mxu0 %v251
  %v400 = vpop.f32.mrf.mxu0
  %v401 = vadd.f32 %v362, %v400
  %v402 = vpop.f32.mrf.mxu0
  %v403 = vadd.f32 %v364, %v402
  %404 = vmatmul.bf16.gmra.mxu0 %v254
  %v405 = vpop.f32.mrf.mxu0
  %v406 = vadd.f32 %v367, %v405
  %v407 = vpop.f32.mrf.mxu0
  %v408 = vadd.f32 %v369, %v407
  %409 = vmatmul.bf16.gmra.mxu0 %v257
  %v410 = vpop.f32.mrf.mxu0
  %v411 = vadd.f32 %v372, %v410
  %v412 = vpop.f32.mrf.mxu0
  %v413 = vadd.f32 %v374, %v412
  %414 = vdwg.mxu0
  %v415 = vmax.f32 %v386, 0.0
  %v416 = vmax.f32 %v388, 0.0
  %v417 = vmax.f32 %v391, 0.0
  %v418 = vmax.f32 %v393, 0.0
  %v419 = vmax.f32 %v396, 0.0
  %v420 = vmax.f32 %v398, 0.0
  %v421 = vmax.f32 %v401, 0.0
  %v422 = vmax.f32 %v403, 0.0
  %v423 = vmax.f32 %v406, 0.0
  %v424 = vmax.f32 %v408, 0.0
  %v425 = vmax.f32 %v411, 0.0
  %v426 = vmax.f32 %v413, 0.0
  %427 = vst [vmem:[%s3] sm:$0xff] %v415
  %428 = vst [vmem:[%s3 + $0x8] sm:$0xff] %v416
  %429 = vst [vmem:[%s3 + $0x10] sm:$0xff] %v417
  %430 = vst [vmem:[%s3 + $0x18] sm:$0xff] %v418
  %431 = vst [vmem:[%s3 + $0x20] sm:$0xff] %v419
  %432 = vst [vmem:[%s3 + $0x28] sm:$0xff] %v420
  %433 = vst [vmem:[%s3 + $0x30] sm:$0xff] %v421
  %434 = vst [vmem:[%s3 + $0x38] sm:$0xff] %v422
  %435 = vst [vmem:[%s3 + $0x40] sm:$0xff] %v423
  %436 = vst [vmem:[%s3 + $0x48] sm:$0xff] %v424
  %437 = vst [vmem:[%s3 + $0x50] sm:$0xff] %v425
  %438 = vst [vmem:[%s3 + $0x58] sm:$0xff] %v426
  // Predicated region
  $region14: #{autoencoder_forward.9} parent=0 // pred_check
    _
  $region15: #{autoencoder_forward.9} parent=0 // pred_check_branch
    %440 = sbr.rel (0) target = $region17
  $region16: #{autoencoder_forward.9} parent=0 // pred_region
    _
  $region17: #{autoencoder_forward.9} parent=0 // pred_fallthru
    _
  // Predicated region
  $region18: #{autoencoder_forward.9} parent=0 // pred_check
    _
  $region19: #{autoencoder_forward.9} parent=0 // pred_check_branch
    %442 = sbr.rel (0) target = $region21
  $region20: #{autoencoder_forward.9} parent=0 // pred_region
    _
  $region21: #{autoencoder_forward.9} parent=0 // pred_fallthru
    _

// kernel: tile.23
$region0: #{tile.23}
  #allocation0 [shape = 's32[1]{0}', space=sflag, size = 0x4, scoped, tag = 'scoped memory for tile.23']
  %s0 = inlined_call_operand.vmem [shape: f32[12], index: 0, kind: input, shape index: {}]
  %s1 = inlined_call_operand.vmem [shape: f32[4,12], index: 1, kind: output, shape index: {}]
  // Predicated region
  $region2: #{tile.23} parent=0 // pred_check
    _
  $region3: #{tile.23} parent=0 // pred_check_branch
    %3 = sbr.rel (0) target = $region5
  $region4: #{tile.23} parent=0 // pred_region
    _
  $region5: #{tile.23} parent=0 // pred_fallthru
    _
  %v4 = vld [vmem:[%s0] ss:$0 sm:$0xff]
  %5 = vst [vmem:[%s1] sm:$0xf] %v4

// kernel: autoencoder_forward.10
$region0: #{autoencoder_forward.10}
  #allocation0 [shape = 'u32[]', space=smem, size = 0x4, offset = 0x4, fixed_abs, tag = 'smem constant byte address 0x4 - core index']
  #allocation1 [shape = 'u32[72,128]{1,0:T(1,128)}', space=vmem, size = 0x9000, scoped, tag = 'internal scratch']
  %s0 = inlined_call_operand.vmem [shape: f32[48,216], index: 0, kind: input, shape index: {}]
  %s1 = inlined_call_operand.vmem [shape: f32[216,128], index: 1, kind: input, shape index: {}]
  %s2 = inlined_call_operand.vmem [shape: f32[48,1], index: 2, kind: input, shape index: {}]
  %s3 = inlined_call_operand.vmem [shape: f32[48,128], index: 3, kind: output, shape index: {}]
  %s4 = sld [smem:[#allocation0]]
  $region22: #{autoencoder_forward.10} parent=0
    _
  %s6 = ssub.s32 1, %s4
  %s7 = scalar_select 0, %s6, %s4
  // Predicated region
  $region2: #{autoencoder_forward.10} parent=0 // pred_check
    _
  $region3: #{autoencoder_forward.10} parent=0 // pred_check_branch
    %9 = sbr.rel (0) target = $region5
  $region4: #{autoencoder_forward.10} parent=0 // pred_region
    _
  $region5: #{autoencoder_forward.10} parent=0 // pred_fallthru
    _
  // Predicated region
  $region6: #{autoencoder_forward.10} parent=0 // pred_check
    _
  $region7: #{autoencoder_forward.10} parent=0 // pred_check_branch
    %11 = sbr.rel (0) target = $region9
  $region8: #{autoencoder_forward.10} parent=0 // pred_region
    _
  $region9: #{autoencoder_forward.10} parent=0 // pred_fallthru
    _
  // Predicated region
  $region10: #{autoencoder_forward.10} parent=0 // pred_check
    _
  $region11: #{autoencoder_forward.10} parent=0 // pred_check_branch
    %13 = sbr.rel (0) target = $region13
  $region12: #{autoencoder_forward.10} parent=0 // pred_region
    _
  $region13: #{autoencoder_forward.10} parent=0 // pred_fallthru
    _
  %v15 = vld [vmem:[%s0] sm:$0xff]
  %v16 = vld [vmem:[%s0 + $0x8] sm:$0xff]
  %v17 = vld [vmem:[%s0 + $0x10] sm:$0xff]
  %v18 = vld [vmem:[%s0 + $0x18] sm:$0xff]
  %v19 = vld [vmem:[%s0 + $0x20] sm:$0xff]
  %v20 = vld [vmem:[%s0 + $0x28] sm:$0xff]
  %v21 = vld [vmem:[%s0 + $0x30] sm:$0xff]
  %v22 = vld [vmem:[%s0 + $0x38] sm:$0xff]
  %v23 = vld [vmem:[%s0 + $0x40] sm:$0xff]
  %v24 = vld [vmem:[%s0 + $0x48] sm:$0xff]
  %v25 = vld [vmem:[%s0 + $0x50] sm:$0xff]
  %v26 = vld [vmem:[%s0 + $0x58] sm:$0xff]
  %v27 = vpack.c.bf16 %v17, %v15
  %v28 = vpack.c.bf16 %v18, %v16
  %v29 = vpack.c.bf16 %v21, %v19
  %v30 = vpack.c.bf16 %v22, %v20
  %v31 = vpack.c.bf16 %v25, %v23
  %v32 = vpack.c.bf16 %v26, %v24
  %v33 = vld [vmem:[%s1] sm:$0xff]
  %v34 = vld [vmem:[%s1 + $0x8] sm:$0xff]
  %v35 = vld [vmem:[%s1 + $0x10] sm:$0xff]
  %v36 = vld [vmem:[%s1 + $0x18] sm:$0xff]
  %v37 = vld [vmem:[%s1 + $0x20] sm:$0xff]
  %v38 = vld [vmem:[%s1 + $0x28] sm:$0xff]
  %v39 = vld [vmem:[%s1 + $0x30] sm:$0xff]
  %v40 = vld [vmem:[%s1 + $0x38] sm:$0xff]
  %v41 = vld [vmem:[%s1 + $0x40] sm:$0xff]
  %v42 = vld [vmem:[%s1 + $0x48] sm:$0xff]
  %v43 = vld [vmem:[%s1 + $0x50] sm:$0xff]
  %v44 = vld [vmem:[%s1 + $0x58] sm:$0xff]
  %v45 = vld [vmem:[%s1 + $0x60] sm:$0xff]
  %v46 = vld [vmem:[%s1 + $0x68] sm:$0xff]
  %v47 = vld [vmem:[%s1 + $0x70] sm:$0xff]
  %v48 = vld [vmem:[%s1 + $0x78] sm:$0xff]
  %v49 = vld [vmem:[%s1 + $0x80] sm:$0xff]
  %v50 = vld [vmem:[%s1 + $0x88] sm:$0xff]
  %v51 = vld [vmem:[%s1 + $0x90] sm:$0xff]
  %v52 = vld [vmem:[%s1 + $0x98] sm:$0xff]
  %v53 = vld [vmem:[%s1 + $0xa0] sm:$0xff]
  %v54 = vld [vmem:[%s1 + $0xa8] sm:$0xff]
  %v55 = vld [vmem:[%s1 + $0xb0] sm:$0xff]
  %v56 = vld [vmem:[%s1 + $0xb8] sm:$0xff]
  %v57 = vld [vmem:[%s1 + $0xc0] sm:$0xff]
  %v58 = vld [vmem:[%s1 + $0xc8] sm:$0xff]
  %v59 = vld [vmem:[%s1 + $0xd0] sm:$0xff]
  %v60 = vpack.c.bf16 %v34, %v33
  %v61 = vpack.c.bf16 %v36, %v35
  %v62 = vpack.c.bf16 %v38, %v37
  %v63 = vpack.c.bf16 %v40, %v39
  %v64 = vpack.c.bf16 %v42, %v41
  %v65 = vpack.c.bf16 %v44, %v43
  %v66 = vpack.c.bf16 %v46, %v45
  %v67 = vpack.c.bf16 %v48, %v47
  %v68 = vpack.c.bf16 %v50, %v49
  %v69 = vpack.c.bf16 %v52, %v51
  %v70 = vpack.c.bf16 %v54, %v53
  %v71 = vpack.c.bf16 %v56, %v55
  %v72 = vpack.c.bf16 %v58, %v57
  %v73 = vpack.c.bf16 %v59, %v59
  %v74 = vld [vmem:[%s2] sm:$0xff]
  %v75 = vld [vmem:[%s2 + $0x8] sm:$0xff]
  %v76 = vld [vmem:[%s2 + $0x10] sm:$0xff]
  %v77 = vld [vmem:[%s2 + $0x18] sm:$0xff]
  %v78 = vld [vmem:[%s2 + $0x20] sm:$0xff]
  %v79 = vld [vmem:[%s2 + $0x28] sm:$0xff]
  %81 = vset.pattern.permute.xlu0 0
  %82 = vperm.xlu0 %81, %v74
  %v83 = vpop.permute.xlu0 %82
  %86 = vset.pattern.permute.xlu0 0
  %87 = vperm.xlu0 %86, %v75
  %v88 = vpop.permute.xlu0 %87
  %91 = vset.pattern.permute.xlu0 0
  %92 = vperm.xlu0 %91, %v76
  %v93 = vpop.permute.xlu0 %92
  %96 = vset.pattern.permute.xlu0 0
  %97 = vperm.xlu0 %96, %v77
  %v98 = vpop.permute.xlu0 %97
  %101 = vset.pattern.permute.xlu0 0
  %102 = vperm.xlu0 %101, %v78
  %v103 = vpop.permute.xlu0 %102
  %106 = vset.pattern.permute.xlu0 0
  %107 = vperm.xlu0 %106, %v79
  %v108 = vpop.permute.xlu0 %107
  %vm110 = vcmask 719872
  %v112 = vsel %vm110, %v28, 0
  %v115 = vsel %vm110, %v30, 0
  %v118 = vsel %vm110, %v32, 0
  %vm120 = vcmask 1043456
  %v122 = vsel %vm120, %v73, 0
  %124 = vmatpush.bf16.msra.mxu0 %v67
  %125 = vmatpush.bf16.msra.mxu0 %v66
  %126 = vmatpush.bf16.msra.mxu0 %v65
  %127 = vmatpush.bf16.msra.mxu0 %v64
  %128 = vmatpush.bf16.msra.mxu0 %v63
  %129 = vmatpush.bf16.msra.mxu0 %v62
  %130 = vmatpush.bf16.msra.mxu0 %v61
  %131 = vmatpush.bf16.msra.mxu0 %v60
  %132 = vmatmul.bf16.gmra.mxu0 %v27
  %v133 = vpop.f32.mrf.mxu0
  %v134 = vadd.f32 %v83, %v133
  %v135 = vpop.f32.mrf.mxu0
  %v136 = vadd.f32 %v88, %v135
  %137 = vmatmul.bf16.gmra.mxu0 %v29
  %v138 = vpop.f32.mrf.mxu0
  %v139 = vadd.f32 %v93, %v138
  %v140 = vpop.f32.mrf.mxu0
  %v141 = vadd.f32 %v98, %v140
  %142 = vmatmul.bf16.gmra.mxu0 %v31
  %v143 = vpop.f32.mrf.mxu0
  %v144 = vadd.f32 %v103, %v143
  %v145 = vpop.f32.mrf.mxu0
  %v146 = vadd.f32 %v108, %v145
  %147 = vdwg.mxu0
  %148 = vmatpush.bf16.msra.mxu0 0
  %149 = vmatpush.bf16.msra.mxu0 0
  %150 = vmatpush.bf16.msra.mxu0 %v122
  %151 = vmatpush.bf16.msra.mxu0 %v72
  %152 = vmatpush.bf16.msra.mxu0 %v71
  %153 = vmatpush.bf16.msra.mxu0 %v70
  %154 = vmatpush.bf16.msra.mxu0 %v69
  %155 = vmatpush.bf16.msra.mxu0 %v68
  %156 = vmatmul.bf16.gmra.mxu0 %v112
  %v157 = vpop.f32.mrf.mxu0
  %v158 = vadd.f32 %v134, %v157
  %v159 = vpop.f32.mrf.mxu0
  %v160 = vadd.f32 %v136, %v159
  %161 = vmatmul.bf16.gmra.mxu0 %v115
  %v162 = vpop.f32.mrf.mxu0
  %v163 = vadd.f32 %v139, %v162
  %v164 = vpop.f32.mrf.mxu0
  %v165 = vadd.f32 %v141, %v164
  %166 = vmatmul.bf16.gmra.mxu0 %v118
  %v167 = vpop.f32.mrf.mxu0
  %v168 = vadd.f32 %v144, %v167
  %v169 = vpop.f32.mrf.mxu0
  %v170 = vadd.f32 %v146, %v169
  %171 = vdwg.mxu0
  %v172 = vmax.f32 %v158, 0.0
  %v173 = vmax.f32 %v160, 0.0
  %v174 = vmax.f32 %v163, 0.0
  %v175 = vmax.f32 %v165, 0.0
  %v176 = vmax.f32 %v168, 0.0
  %v177 = vmax.f32 %v170, 0.0
  %178 = vst [vmem:[%s3] sm:$0xff] %v172
  %179 = vst [vmem:[%s3 + $0x8] sm:$0xff] %v173
  %180 = vst [vmem:[%s3 + $0x10] sm:$0xff] %v174
  %181 = vst [vmem:[%s3 + $0x18] sm:$0xff] %v175
  %182 = vst [vmem:[%s3 + $0x20] sm:$0xff] %v176
  %183 = vst [vmem:[%s3 + $0x28] sm:$0xff] %v177
  // Predicated region
  $region14: #{autoencoder_forward.10} parent=0 // pred_check
    _
  $region15: #{autoencoder_forward.10} parent=0 // pred_check_branch
    %185 = sbr.rel (0) target = $region17
  $region16: #{autoencoder_forward.10} parent=0 // pred_region
    _
  $region17: #{autoencoder_forward.10} parent=0 // pred_fallthru
    _
  // Predicated region
  $region18: #{autoencoder_forward.10} parent=0 // pred_check
    _
  $region19: #{autoencoder_forward.10} parent=0 // pred_check_branch
    %187 = sbr.rel (0) target = $region21
  $region20: #{autoencoder_forward.10} parent=0 // pred_region
    _
  $region21: #{autoencoder_forward.10} parent=0 // pred_fallthru
    _

// kernel: tile.28
$region0: #{tile.28}
  #allocation0 [shape = 's32[1]{0}', space=sflag, size = 0x4, scoped, tag = 'scoped memory for tile.28']
  %s0 = inlined_call_operand.vmem [shape: f32[3], index: 0, kind: input, shape index: {}]
  %s1 = inlined_call_operand.vmem [shape: f32[4,3], index: 1, kind: output, shape index: {}]
  // Predicated region
  $region2: #{tile.28} parent=0 // pred_check
    _
  $region3: #{tile.28} parent=0 // pred_check_branch
    %3 = sbr.rel (0) target = $region5
  $region4: #{tile.28} parent=0 // pred_region
    _
  $region5: #{tile.28} parent=0 // pred_fallthru
    _
  %v4 = vld [vmem:[%s0] ss:$0 sm:$0xff]
  %5 = vst [vmem:[%s1] sm:$0xf] %v4

// kernel: tile.29
$region0: #{tile.29}
  %s0 = inlined_call_operand.vmem [shape: f32[4,3], index: 0, kind: input, shape index: {}]
  %s1 = inlined_call_operand.vmem [shape: f32[12], index: 1, kind: output, shape index: {}]
  $region1: #{tile.29} parent=0
    #allocation0 [shape = 'u8[4096]{0}', space=vmem, size = 0x1000, scoped, tag = 'scoped mem for output reshape']
    #allocation1 [shape = 'u8[4096]{0}', space=vmem, size = 0x1000, scoped, tag = 'scoped mem for input reshape']
    %s3 = ssub.s32 16, 1
    %v4 = vld [vmem:[%s0] sm:%s3]
    %5 = vst [vmem:[#allocation1] sm:%s3] %v4
    %v6 = vld [vmem:[#allocation1] sm:$0x1]
    %vm7 = vcmask 23552
    %8 = vst.msk [vmem:[#allocation0] sm:$0x1] %vm7, %v6
    %s9 = scalar_lea.vmem [#allocation1], 3
    %v10 = vld [vmem:[%s9] sm:$0x1]
    %11 = vrot.lane.b32.xlu0 %v10, 9
    %v12 = vpop.permute.xlu0 %11
    %vm13 = vcmask 97352
    %14 = vst.msk [vmem:[#allocation0] sm:$0x1] %vm13, %v12
    %s15 = scalar_lea.vmem [#allocation1], 2
    %v16 = vld [vmem:[%s15] sm:$0x1]
    %17 = vrot.lane.b32.xlu0 %v16, 6
    %v18 = vpop.permute.xlu0 %17
    %vm19 = vcmask 72752
    %20 = vst.msk [vmem:[#allocation0] sm:$0x1] %vm19, %v18
    %s21 = scalar_lea.vmem [#allocation1], 1
    %v22 = vld [vmem:[%s21] sm:$0x1]
    %23 = vrot.lane.b32.xlu0 %v22, 3
    %v24 = vpop.permute.xlu0 %23
    %vm25 = vcmask 48152
    %26 = vst.msk [vmem:[#allocation0] sm:$0x1] %vm25, %v24
    %s28 = ssub.s32 2, 1
    %v29 = vld [vmem:[#allocation0] sm:%s28]
    %s31 = ssub.s32 2, 1
    %32 = vst [vmem:[%s1] sm:%s31] %v29

// kernel: autoencoder_forward.11
$region0: #{autoencoder_forward.11}
  #allocation0 [shape = 'u32[]', space=smem, size = 0x4, offset = 0x4, fixed_abs, tag = 'smem constant byte address 0x4 - core index']
  #allocation1 [shape = 'u32[72,128]{1,0:T(1,128)}', space=vmem, size = 0x9000, scoped, tag = 'internal scratch']
  %s0 = inlined_call_operand.vmem [shape: f32[16,108], index: 0, kind: input, shape index: {}]
  %s1 = inlined_call_operand.vmem [shape: f32[108,128], index: 1, kind: input, shape index: {}]
  %s2 = inlined_call_operand.vmem [shape: f32[16,1], index: 2, kind: input, shape index: {}]
  %s3 = inlined_call_operand.vmem [shape: f32[16,128], index: 3, kind: output, shape index: {}]
  %s4 = sld [smem:[#allocation0]]
  $region22: #{autoencoder_forward.11} parent=0
    _
  %s6 = ssub.s32 1, %s4
  %s7 = scalar_select 0, %s6, %s4
  // Predicated region
  $region2: #{autoencoder_forward.11} parent=0 // pred_check
    _
  $region3: #{autoencoder_forward.11} parent=0 // pred_check_branch
    %9 = sbr.rel (0) target = $region5
  $region4: #{autoencoder_forward.11} parent=0 // pred_region
    _
  $region5: #{autoencoder_forward.11} parent=0 // pred_fallthru
    _
  // Predicated region
  $region6: #{autoencoder_forward.11} parent=0 // pred_check
    _
  $region7: #{autoencoder_forward.11} parent=0 // pred_check_branch
    %11 = sbr.rel (0) target = $region9
  $region8: #{autoencoder_forward.11} parent=0 // pred_region
    _
  $region9: #{autoencoder_forward.11} parent=0 // pred_fallthru
    _
  // Predicated region
  $region10: #{autoencoder_forward.11} parent=0 // pred_check
    _
  $region11: #{autoencoder_forward.11} parent=0 // pred_check_branch
    %13 = sbr.rel (0) target = $region13
  $region12: #{autoencoder_forward.11} parent=0 // pred_region
    _
  $region13: #{autoencoder_forward.11} parent=0 // pred_fallthru
    _
  %v15 = vld [vmem:[%s0] sm:$0xff]
  %v16 = vld [vmem:[%s0 + $0x8] sm:$0xff]
  %v17 = vpack.c.bf16 %v16, %v15
  %v18 = vld [vmem:[%s1] sm:$0xff]
  %v19 = vld [vmem:[%s1 + $0x8] sm:$0xff]
  %v20 = vld [vmem:[%s1 + $0x10] sm:$0xff]
  %v21 = vld [vmem:[%s1 + $0x18] sm:$0xff]
  %v22 = vld [vmem:[%s1 + $0x20] sm:$0xff]
  %v23 = vld [vmem:[%s1 + $0x28] sm:$0xff]
  %v24 = vld [vmem:[%s1 + $0x30] sm:$0xff]
  %v25 = vld [vmem:[%s1 + $0x38] sm:$0xff]
  %v26 = vld [vmem:[%s1 + $0x40] sm:$0xff]
  %v27 = vld [vmem:[%s1 + $0x48] sm:$0xff]
  %v28 = vld [vmem:[%s1 + $0x50] sm:$0xff]
  %v29 = vld [vmem:[%s1 + $0x58] sm:$0xff]
  %v30 = vld [vmem:[%s1 + $0x60] sm:$0xff]
  %v31 = vld [vmem:[%s1 + $0x68] sm:$0xf]
  %v32 = vpack.c.bf16 %v19, %v18
  %v33 = vpack.c.bf16 %v21, %v20
  %v34 = vpack.c.bf16 %v23, %v22
  %v35 = vpack.c.bf16 %v25, %v24
  %v36 = vpack.c.bf16 %v27, %v26
  %v37 = vpack.c.bf16 %v29, %v28
  %v38 = vpack.c.bf16 %v31, %v30
  %v39 = vld [vmem:[%s2] sm:$0xff]
  %v40 = vld [vmem:[%s2 + $0x8] sm:$0xff]
  %42 = vset.pattern.permute.xlu0 0
  %43 = vperm.xlu0 %42, %v39
  %v44 = vpop.permute.xlu0 %43
  %47 = vset.pattern.permute.xlu0 0
  %48 = vperm.xlu0 %47, %v40
  %v49 = vpop.permute.xlu0 %48
  %vm51 = vcmask 883712
  %v53 = vsel %vm51, %v17, 0
  %vm55 = vcmask 1045504
  %v57 = vsel %vm55, %v38, 0
  %59 = vmatpush.bf16.msra.mxu0 0
  %60 = vmatpush.bf16.msra.mxu0 %v57
  %61 = vmatpush.bf16.msra.mxu0 %v37
  %62 = vmatpush.bf16.msra.mxu0 %v36
  %63 = vmatpush.bf16.msra.mxu0 %v35
  %64 = vmatpush.bf16.msra.mxu0 %v34
  %65 = vmatpush.bf16.msra.mxu0 %v33
  %66 = vmatpush.bf16.msra.mxu0 %v32
  %67 = vmatmul.bf16.gmra.mxu0 %v53
  %v68 = vpop.f32.mrf.mxu0
  %v69 = vadd.f32 %v44, %v68
  %v70 = vpop.f32.mrf.mxu0
  %v71 = vadd.f32 %v49, %v70
  %72 = vdwg.mxu0
  %73 = vst [vmem:[%s3] sm:$0xff] %v69
  %74 = vst [vmem:[%s3 + $0x8] sm:$0xff] %v71
  // Predicated region
  $region14: #{autoencoder_forward.11} parent=0 // pred_check
    _
  $region15: #{autoencoder_forward.11} parent=0 // pred_check_branch
    %76 = sbr.rel (0) target = $region17
  $region16: #{autoencoder_forward.11} parent=0 // pred_region
    _
  $region17: #{autoencoder_forward.11} parent=0 // pred_fallthru
    _
  // Predicated region
  $region18: #{autoencoder_forward.11} parent=0 // pred_check
    _
  $region19: #{autoencoder_forward.11} parent=0 // pred_check_branch
    %78 = sbr.rel (0) target = $region21
  $region20: #{autoencoder_forward.11} parent=0 // pred_region
    _
  $region21: #{autoencoder_forward.11} parent=0 // pred_fallthru
    _

</llo_original>
